<compile_context>
chip_gen: v6e
topology: v6e:2x2x1
jax: 0.10.0
libtpu: 0.0.40
codegen_flags: <defaults>
</compile_context>

<pallas_src>
import math

import jax
import jax.numpy as jnp
from jax.experimental import pallas as pl
from jax.experimental.pallas import tpu as pltpu

EMB_DIM = 100
HIDDEN = (64, 32, 16)

_MIN_TILE = 16  # bf16 sublane tile is (16, 128): batch tiles stay multiples of 16


def _round_up(x, m):
    return ((x + m - 1) // m) * m


def _cdiv(a, b):
    return (a + b - 1) // b


def ncf_kernel(user_ref, item_ref,
               w1u_ref, w1i_ref, b1_ref,
               w2_ref, b2_ref,
               w3_ref, b3_ref,
               w4_ref, b4_ref,
               w5g_ref, w5m_ref, b5_ref,
               out_ref):
    # user_ref/item_ref are (tb, 2E) bf16 rows laid out as [mf | mlp].
    # Upcast once; all math below is f32 (VPU/MXU accumulate in f32).
    user = user_ref[...].astype(jnp.float32)
    item = item_ref[...].astype(jnp.float32)

    # --- GMF branch ----------------------------------------------------------
    # Full-width product [mf_u*mf_i | mlp_u*mlp_i]; the head weight w5g is
    # zero-masked over the mlp half, so no unaligned lane slice is needed.
    prod = user * item

    # --- MLP branch ----------------------------------------------------------
    # concat([mlp_u, mlp_i], -1) @ W1 is computed as user @ W1u_pad +
    # item @ W1i_pad where the mf rows of the padded weights are zero:
    # K = 2E = 200 pads to 256 (one MXU pass on v6e/v7x, two 128-deep on v5e).
    x = (jnp.dot(user, w1u_ref[...], preferred_element_type=jnp.float32)
         + jnp.dot(item, w1i_ref[...], preferred_element_type=jnp.float32)
         + b1_ref[...])
    x = jnp.maximum(x, 0.0)
    # TODO(synk): nn.Dropout is treated as identity (inference / eval mode).
    x = jnp.maximum(
        jnp.dot(x, w2_ref[...], preferred_element_type=jnp.float32) + b2_ref[...], 0.0)
    x = jnp.maximum(
        jnp.dot(x, w3_ref[...], preferred_element_type=jnp.float32) + b3_ref[...], 0.0)
    mlp_out = jnp.dot(x, w4_ref[...], preferred_element_type=jnp.float32) + b4_ref[...]

    # --- NeuMF head: Linear(2E -> 1) as masked weighted reductions + sigmoid --
    # Output kept as a (tb, 1) column: writeback is only 4 B/row vs ~800 B/row
    # of input, so a lane-dense (1, tb) transpose store is not worth it here.
    logit = (jnp.sum(prod * w5g_ref[...], axis=-1, keepdims=True)
             + jnp.sum(mlp_out * w5m_ref[...], axis=-1, keepdims=True)
             + b5_ref[...])
    out_ref[...] = jax.nn.sigmoid(logit)


def init_params(key, num_users, num_items, emb_dim=EMB_DIM, hidden=HIDDEN):
    """PyTorch-layout parameters (f32, separate tables, W as (in, out))."""
    ks = jax.random.split(key, 14)

    def emb(k, n):
        return jax.random.normal(k, (n, emb_dim), jnp.float32) * 0.1

    def lin(kw, kb, fan_in, fan_out):
        bound = 1.0 / math.sqrt(fan_in)
        w = jax.random.uniform(kw, (fan_in, fan_out), jnp.float32, -bound, bound)
        b = jax.random.uniform(kb, (fan_out,), jnp.float32, -bound, bound)
        return w, b

    params = {
        "mf_user": emb(ks[0], num_users),
        "mf_item": emb(ks[1], num_items),
        "mlp_user": emb(ks[2], num_users),
        "mlp_item": emb(ks[3], num_items),
    }
    params["w1"], params["b1"] = lin(ks[4], ks[5], emb_dim * 2, hidden[0])
    params["w2"], params["b2"] = lin(ks[6], ks[7], hidden[0], hidden[1])
    params["w3"], params["b3"] = lin(ks[8], ks[9], hidden[1], hidden[2])
    params["w4"], params["b4"] = lin(ks[10], ks[11], hidden[2], emb_dim)
    params["w5"], params["b5"] = lin(ks[12], ks[13], emb_dim * 2, 1)
    return params


def pack_params(params):
    """One-time repack of PyTorch-layout params into the kernel layout.

    * MF/MLP tables concatenated per entity, stored bf16 (halves gather and
      kernel-input HBM traffic; matmul accumulation stays f32).
    * W1 and the head weight re-expressed against the packed [mf | mlp] rows
      via zero padding (no unaligned lane slicing in the kernel).
    """
    e = params["mf_user"].shape[1]
    h1 = params["w1"].shape[1]
    zeros_w1 = jnp.zeros((e, h1), jnp.float32)
    return {
        "user_table": jnp.concatenate(
            [params["mf_user"], params["mlp_user"]], axis=1).astype(jnp.bfloat16),
        "item_table": jnp.concatenate(
            [params["mf_item"], params["mlp_item"]], axis=1).astype(jnp.bfloat16),
        # torch concat order: W1 rows 0..E-1 act on mlp_user, rows E..2E-1 on
        # mlp_item; packed rows are [mf | mlp] so the mf half gets zero weights.
        "w1u": jnp.concatenate([zeros_w1, params["w1"][:e]], axis=0),
        "w1i": jnp.concatenate([zeros_w1, params["w1"][e:]], axis=0),
        "b1": params["b1"][None, :],
        "w2": params["w2"], "b2": params["b2"][None, :],
        "w3": params["w3"], "b3": params["b3"][None, :],
        "w4": params["w4"], "b4": params["b4"][None, :],
        # NeuMF head: gmf part zero-masked over the mlp half of `prod`.
        "w5g": jnp.concatenate(
            [params["w5"][:e, 0], jnp.zeros((e,), jnp.float32)])[None, :],
        "w5m": params["w5"][e:, 0][None, :],
        "b5": params["b5"].reshape(1, 1),
    }


def ncf_forward(kparams, user_indices, item_indices, *, tb=1024):
    user_table = kparams["user_table"]
    item_table = kparams["item_table"]
    two_e = user_table.shape[1]
    B = user_indices.shape[0]

    # ---- batch tile selection ------------------------------------------------
    # Big tiles amortize the ~0.35 us/step pipeline overhead (the kernel is
    # HBM-bound), but whenever the batch allows it we force an even count of
    # >= 2 roughly equal steps so v7x's two TensorCores both get balanced work
    # under dimension_semantics=("parallel",).  No effect on v5e/v6e beyond
    # tile sizing.  Tiles are multiples of 16 (bf16 sublane tile).
    tb_cap = max(_MIN_TILE, _round_up(tb, _MIN_TILE))
    b_aligned = _round_up(B, _MIN_TILE)
    if b_aligned < 2 * _MIN_TILE:
        tb_eff = b_aligned                       # batch too small to split
    else:
        n_half = 1                               # grid gets ~2*n_half steps
        while _round_up(_cdiv(b_aligned, 2 * n_half), _MIN_TILE) > tb_cap:
            n_half += 1
        tb_eff = _round_up(_cdiv(b_aligned, 2 * n_half), _MIN_TILE)
    Bp = _round_up(B, tb_eff)

    # Pad index vectors to the tile multiple; padded rows gather row 0 and
    # their outputs are sliced off below.
    if Bp != B:
        pad = Bp - B
        user_indices = jnp.concatenate(
            [user_indices, jnp.zeros((pad,), user_indices.dtype)])
        item_indices = jnp.concatenate(
            [item_indices, jnp.zeros((pad,), item_indices.dtype)])

    # Embedding lookups stay in XLA glue (one gather per index thanks to the
    # packed tables).
    # TODO(synk): an in-kernel gather (scalar-prefetched indices + per-row
    # HBM->VMEM DMAs from pl.ANY tables) would cut HBM traffic ~3x by dropping
    # the gathered-array write+read round trip, but at 400 B/row it needs ~2*tb
    # descriptors per tile and descriptor issue alone (~10 cyc each) costs far
    # more than the tile's ideal HBM time — so the XLA gather is kept.
    user_rows = user_table[user_indices]   # (Bp, 2E) bf16
    item_rows = item_table[item_indices]   # (Bp, 2E) bf16

    weight_names = ("w1u", "w1i", "b1", "w2", "b2", "w3", "b3",
                    "w4", "b4", "w5g", "w5m", "b5")
    weights = [kparams[name] for name in weight_names]

    row_spec = pl.BlockSpec((tb_eff, two_e), lambda i: (i, 0))
    # Constant index_map -> each weight is DMA'd once and then revisited.
    # TODO(synk): pipeline_mode=pl.Buffered(1) on these would drop the unused
    # second buffer per weight; small VMEM/bookkeeping win only.
    fixed_specs = [pl.BlockSpec(w.shape, lambda i: (0, 0)) for w in weights]

    # VMEM limit sized to demand (+ slack), not a blanket 32-48 MiB floor:
    # keeps headroom inside v7x's 64 MiB physical VMEM and stays portable.
    lane_pad = _round_up(two_e, 128)
    pipe_bytes = 2 * 2 * tb_eff * lane_pad * 2          # 2 bf16 inputs, double-buffered
    temp_bytes = 8 * tb_eff * lane_pad * 4              # f32 in-kernel temporaries
    weight_bytes = 2 * sum(
        _round_up(w.shape[0], 8) * _round_up(w.shape[1], 128) * 4 for w in weights)
    vmem_limit = int(min(48 << 20,
                         pipe_bytes + temp_bytes + weight_bytes + (6 << 20)))

    out = pl.pallas_call(
        ncf_kernel,
        out_shape=jax.ShapeDtypeStruct((Bp, 1), jnp.float32),
        grid_spec=pltpu.PrefetchScalarGridSpec(
            num_scalar_prefetch=0,
            grid=(Bp // tb_eff,),
            in_specs=[row_spec, row_spec] + fixed_specs,
            out_specs=pl.BlockSpec((tb_eff, 1), lambda i: (i, 0)),
        ),
        compiler_params=pltpu.CompilerParams(
            dimension_semantics=("parallel",),   # batch tiles shard across v7x's 2 TCs
            vmem_limit_bytes=vmem_limit),
    )(user_rows, item_rows, *weights)
    return out[:B, 0]  # matches torch output.squeeze()


def ncf_reference(params, user_indices, item_indices):
    mf_u = params["mf_user"][user_indices]
    mf_i = params["mf_item"][item_indices]
    mlp_u = params["mlp_user"][user_indices]
    mlp_i = params["mlp_item"][item_indices]
    gmf = mf_u * mf_i
    x = jnp.concatenate([mlp_u, mlp_i], axis=-1)
    x = jnp.maximum(x @ params["w1"] + params["b1"], 0.0)
    x = jnp.maximum(x @ params["w2"] + params["b2"], 0.0)
    x = jnp.maximum(x @ params["w3"] + params["b3"], 0.0)
    x = x @ params["w4"] + params["b4"]
    z = jnp.concatenate([gmf, x], axis=-1)
    return jax.nn.sigmoid(z @ params["w5"] + params["b5"]).squeeze()


if __name__ == "__main__":
    # Small but non-trivial: batch not a multiple of 16 nor of the tile size,
    # so padding, the >=2-step grid, and the multi-tile path are all exercised.
    num_users, num_items, batch = 50, 60, 200
    key = jax.random.PRNGKey(0)
    kp, ku, ki = jax.random.split(key, 3)

    params = init_params(kp, num_users, num_items)
    kparams = pack_params(params)   # one-time repack (bf16 packed tables etc.)
    user_indices = jax.random.randint(ku, (batch,), 0, num_users, dtype=jnp.int32)
    item_indices = jax.random.randint(ki, (batch,), 0, num_items, dtype=jnp.int32)

    ref = ncf_reference(params, user_indices, item_indices)
    # Reference with embeddings round-tripped through bf16: isolates the
    # intentional storage-precision change from any kernel-math error.
    params_q = dict(params)
    for name in ("mf_user", "mf_item", "mlp_user", "mlp_item"):
        params_q[name] = params[name].astype(jnp.bfloat16).astype(jnp.float32)
    ref_q = ncf_reference(params_q, user_indices, item_indices)

    # Default config: 2 balanced tiles (v7x 2-TC path + padded tail).
    out_big = jax.block_until_ready(
        ncf_forward(kparams, user_indices, item_indices))
    # Smaller tile cap: 4-step grid + padded tail tile.
    out_tiled = jax.block_until_ready(
        ncf_forward(kparams, user_indices, item_indices, tb=64))

    assert out_big.shape == (batch,)
    assert out_tiled.shape == (batch,)
    # Tiling must not change per-row results.
    assert jnp.allclose(out_big, out_tiled, atol=1e-5, rtol=1e-5)
    # Kernel math is faithful given bf16-stored embeddings...
    assert jnp.allclose(out_big, ref_q, atol=2e-3, rtol=2e-3), (out_big, ref_q)
    assert jnp.allclose(out_tiled, ref_q, atol=2e-3, rtol=2e-3)
    # ...and matches the full-f32 reference up to bf16 embedding quantization.
    assert jnp.allclose(out_big, ref, atol=1e-2, rtol=1e-2), (out_big, ref)
    assert jnp.allclose(out_tiled, ref, atol=1e-2, rtol=1e-2)
    print("KERNEL_OK")
</pallas_src>

<mosaic_0001>
module attributes {stable_mosaic.version = 11 : i64} {
  func.func @ncf_kernel(%arg0: i32, %arg1: memref<112x200xbf16, #tpu.memory_space<vmem>>, %arg2: memref<112x200xbf16, #tpu.memory_space<vmem>>, %arg3: memref<200x64xf32, #tpu.memory_space<vmem>>, %arg4: memref<200x64xf32, #tpu.memory_space<vmem>>, %arg5: memref<1x64xf32, #tpu.memory_space<vmem>>, %arg6: memref<64x32xf32, #tpu.memory_space<vmem>>, %arg7: memref<1x32xf32, #tpu.memory_space<vmem>>, %arg8: memref<32x16xf32, #tpu.memory_space<vmem>>, %arg9: memref<1x16xf32, #tpu.memory_space<vmem>>, %arg10: memref<16x100xf32, #tpu.memory_space<vmem>>, %arg11: memref<1x100xf32, #tpu.memory_space<vmem>>, %arg12: memref<1x200xf32, #tpu.memory_space<vmem>>, %arg13: memref<1x100xf32, #tpu.memory_space<vmem>>, %arg14: memref<1x1xf32, #tpu.memory_space<vmem>>, %arg15: memref<112x1xf32, #tpu.memory_space<vmem>>) attributes {dimension_semantics = [#tpu.dimension_semantics<parallel>], iteration_bounds = array<i64: 2>, scalar_prefetch = 0 : i64, scratch_operands = 0 : i64, tpu.core_type = #tpu.core_type<tc>, window_params = [{transform_indices = @transform_0, window_bounds = array<i64: 112, 200>}, {transform_indices = @transform_1, window_bounds = array<i64: 112, 200>}, {pipeline_mode = #tpu.pipeline_mode<synchronous>, transform_indices = @transform_2, window_bounds = array<i64: 200, 64>}, {pipeline_mode = #tpu.pipeline_mode<synchronous>, transform_indices = @transform_3, window_bounds = array<i64: 200, 64>}, {pipeline_mode = #tpu.pipeline_mode<synchronous>, transform_indices = @transform_4, window_bounds = array<i64: 1, 64>}, {pipeline_mode = #tpu.pipeline_mode<synchronous>, transform_indices = @transform_5, window_bounds = array<i64: 64, 32>}, {pipeline_mode = #tpu.pipeline_mode<synchronous>, transform_indices = @transform_6, window_bounds = array<i64: 1, 32>}, {pipeline_mode = #tpu.pipeline_mode<synchronous>, transform_indices = @transform_7, window_bounds = array<i64: 32, 16>}, {pipeline_mode = #tpu.pipeline_mode<synchronous>, transform_indices = @transform_8, window_bounds = array<i64: 1, 16>}, {pipeline_mode = #tpu.pipeline_mode<synchronous>, transform_indices = @transform_9, window_bounds = array<i64: 16, 100>}, {pipeline_mode = #tpu.pipeline_mode<synchronous>, transform_indices = @transform_10, window_bounds = array<i64: 1, 100>}, {pipeline_mode = #tpu.pipeline_mode<synchronous>, transform_indices = @transform_11, window_bounds = array<i64: 1, 200>}, {pipeline_mode = #tpu.pipeline_mode<synchronous>, transform_indices = @transform_12, window_bounds = array<i64: 1, 100>}, {pipeline_mode = #tpu.pipeline_mode<synchronous>, transform_indices = @transform_13, window_bounds = array<i64: 1, 1>}, {transform_indices = @transform_14, window_bounds = array<i64: 112, 1>}]} {
    %c0 = arith.constant 0 : index
    %c0_0 = arith.constant 0 : index
    %0 = vector.load %arg1[%c0, %c0_0] : memref<112x200xbf16, #tpu.memory_space<vmem>>, vector<112x200xbf16>
    %1 = arith.extf %0 : vector<112x200xbf16> to vector<112x200xf32>
    %c0_1 = arith.constant 0 : index
    %c0_2 = arith.constant 0 : index
    %2 = vector.load %arg2[%c0_1, %c0_2] : memref<112x200xbf16, #tpu.memory_space<vmem>>, vector<112x200xbf16>
    %3 = arith.extf %2 : vector<112x200xbf16> to vector<112x200xf32>
    %4 = arith.mulf %1, %3 : vector<112x200xf32>
    %c0_3 = arith.constant 0 : index
    %c0_4 = arith.constant 0 : index
    %5 = vector.load %arg3[%c0_3, %c0_4] : memref<200x64xf32, #tpu.memory_space<vmem>>, vector<200x64xf32>
    %cst = arith.constant dense<0.000000e+00> : vector<112x64xf32>
    %6 = tpu.matmul %1, %5, %cst {dimension_numbers = #tpu.dot_dimension_numbers<[1], [0], [0], [1], [0, 0, 1, 1], [], []>} : vector<112x200xf32>, vector<200x64xf32>, vector<112x64xf32> -> vector<112x64xf32>
    %c0_5 = arith.constant 0 : index
    %c0_6 = arith.constant 0 : index
    %7 = vector.load %arg4[%c0_5, %c0_6] : memref<200x64xf32, #tpu.memory_space<vmem>>, vector<200x64xf32>
    %cst_7 = arith.constant dense<0.000000e+00> : vector<112x64xf32>
    %8 = tpu.matmul %3, %7, %cst_7 {dimension_numbers = #tpu.dot_dimension_numbers<[1], [0], [0], [1], [0, 0, 1, 1], [], []>} : vector<112x200xf32>, vector<200x64xf32>, vector<112x64xf32> -> vector<112x64xf32>
    %9 = arith.addf %6, %8 : vector<112x64xf32>
    %c0_8 = arith.constant 0 : index
    %c0_9 = arith.constant 0 : index
    %10 = vector.load %arg5[%c0_8, %c0_9] : memref<1x64xf32, #tpu.memory_space<vmem>>, vector<1x64xf32>
    %11 = vector.broadcast %10 : vector<1x64xf32> to vector<112x64xf32>
    %12 = arith.addf %9, %11 : vector<112x64xf32>
    %cst_10 = arith.constant 0.000000e+00 : f32
    %13 = vector.broadcast %cst_10 : f32 to vector<112x64xf32>
    %14 = arith.maximumf %12, %13 : vector<112x64xf32>
    %c0_11 = arith.constant 0 : index
    %c0_12 = arith.constant 0 : index
    %15 = vector.load %arg6[%c0_11, %c0_12] : memref<64x32xf32, #tpu.memory_space<vmem>>, vector<64x32xf32>
    %cst_13 = arith.constant dense<0.000000e+00> : vector<112x32xf32>
    %16 = tpu.matmul %14, %15, %cst_13 {dimension_numbers = #tpu.dot_dimension_numbers<[1], [0], [0], [1], [0, 0, 1, 1], [], []>} : vector<112x64xf32>, vector<64x32xf32>, vector<112x32xf32> -> vector<112x32xf32>
    %c0_14 = arith.constant 0 : index
    %c0_15 = arith.constant 0 : index
    %17 = vector.load %arg7[%c0_14, %c0_15] : memref<1x32xf32, #tpu.memory_space<vmem>>, vector<1x32xf32>
    %18 = vector.broadcast %17 : vector<1x32xf32> to vector<112x32xf32>
    %19 = arith.addf %16, %18 : vector<112x32xf32>
    %cst_16 = arith.constant 0.000000e+00 : f32
    %20 = vector.broadcast %cst_16 : f32 to vector<112x32xf32>
    %21 = arith.maximumf %19, %20 : vector<112x32xf32>
    %c0_17 = arith.constant 0 : index
    %c0_18 = arith.constant 0 : index
    %22 = vector.load %arg8[%c0_17, %c0_18] : memref<32x16xf32, #tpu.memory_space<vmem>>, vector<32x16xf32>
    %cst_19 = arith.constant dense<0.000000e+00> : vector<112x16xf32>
    %23 = tpu.matmul %21, %22, %cst_19 {dimension_numbers = #tpu.dot_dimension_numbers<[1], [0], [0], [1], [0, 0, 1, 1], [], []>} : vector<112x32xf32>, vector<32x16xf32>, vector<112x16xf32> -> vector<112x16xf32>
    %c0_20 = arith.constant 0 : index
    %c0_21 = arith.constant 0 : index
    %24 = vector.load %arg9[%c0_20, %c0_21] : memref<1x16xf32, #tpu.memory_space<vmem>>, vector<1x16xf32>
    %25 = vector.broadcast %24 : vector<1x16xf32> to vector<112x16xf32>
    %26 = arith.addf %23, %25 : vector<112x16xf32>
    %cst_22 = arith.constant 0.000000e+00 : f32
    %27 = vector.broadcast %cst_22 : f32 to vector<112x16xf32>
    %28 = arith.maximumf %26, %27 : vector<112x16xf32>
    %c0_23 = arith.constant 0 : index
    %c0_24 = arith.constant 0 : index
    %29 = vector.load %arg10[%c0_23, %c0_24] : memref<16x100xf32, #tpu.memory_space<vmem>>, vector<16x100xf32>
    %cst_25 = arith.constant dense<0.000000e+00> : vector<112x100xf32>
    %30 = tpu.matmul %28, %29, %cst_25 {dimension_numbers = #tpu.dot_dimension_numbers<[1], [0], [0], [1], [0, 0, 1, 1], [], []>} : vector<112x16xf32>, vector<16x100xf32>, vector<112x100xf32> -> vector<112x100xf32>
    %c0_26 = arith.constant 0 : index
    %c0_27 = arith.constant 0 : index
    %31 = vector.load %arg11[%c0_26, %c0_27] : memref<1x100xf32, #tpu.memory_space<vmem>>, vector<1x100xf32>
    %32 = vector.broadcast %31 : vector<1x100xf32> to vector<112x100xf32>
    %33 = arith.addf %30, %32 : vector<112x100xf32>
    %c0_28 = arith.constant 0 : index
    %c0_29 = arith.constant 0 : index
    %34 = vector.load %arg12[%c0_28, %c0_29] : memref<1x200xf32, #tpu.memory_space<vmem>>, vector<1x200xf32>
    %35 = vector.broadcast %34 : vector<1x200xf32> to vector<112x200xf32>
    %36 = arith.mulf %4, %35 : vector<112x200xf32>
    %cst_30 = arith.constant dense<0.000000e+00> : vector<112xf32>
    %37 = vector.multi_reduction <add>, %36, %cst_30 [1] : vector<112x200xf32> to vector<112xf32>
    %38 = vector.shape_cast %37 : vector<112xf32> to vector<112x1xf32>
    %c0_31 = arith.constant 0 : index
    %c0_32 = arith.constant 0 : index
    %39 = vector.load %arg13[%c0_31, %c0_32] : memref<1x100xf32, #tpu.memory_space<vmem>>, vector<1x100xf32>
    %40 = vector.broadcast %39 : vector<1x100xf32> to vector<112x100xf32>
    %41 = arith.mulf %33, %40 : vector<112x100xf32>
    %cst_33 = arith.constant dense<0.000000e+00> : vector<112xf32>
    %42 = vector.multi_reduction <add>, %41, %cst_33 [1] : vector<112x100xf32> to vector<112xf32>
    %43 = vector.shape_cast %42 : vector<112xf32> to vector<112x1xf32>
    %44 = arith.addf %38, %43 : vector<112x1xf32>
    %c0_34 = arith.constant 0 : index
    %c0_35 = arith.constant 0 : index
    %45 = vector.load %arg14[%c0_34, %c0_35] : memref<1x1xf32, #tpu.memory_space<vmem>>, vector<1x1xf32>
    %46 = vector.broadcast %45 : vector<1x1xf32> to vector<112x1xf32>
    %47 = arith.addf %44, %46 : vector<112x1xf32>
    %48 = arith.negf %47 : vector<112x1xf32>
    %49 = math.exp %48 : vector<112x1xf32>
    %cst_36 = arith.constant 1.000000e+00 : f32
    %50 = vector.broadcast %cst_36 : f32 to vector<112x1xf32>
    %51 = arith.addf %50, %49 : vector<112x1xf32>
    %52 = arith.divf %50, %51 : vector<112x1xf32>
    %c0_37 = arith.constant 0 : index
    %c0_38 = arith.constant 0 : index
    %53 = vector.load %arg15[%c0_37, %c0_38] : memref<112x1xf32, #tpu.memory_space<vmem>>, vector<112x1xf32>
    tpu.vector_store %arg15[%c0_37, %c0_38], %52 {strides = array<i32>} : memref<112x1xf32, #tpu.memory_space<vmem>>, vector<112x1xf32>,
    return
  }
  func.func @transform_0(%arg0: i32) -> (i32, i32) {
    %c0_i32 = arith.constant 0 : i32
    %c0_i32_0 = arith.constant 0 : i32
    return %arg0, %c0_i32 : i32, i32
  }
  func.func @transform_1(%arg0: i32) -> (i32, i32) {
    %c0_i32 = arith.constant 0 : i32
    %c0_i32_0 = arith.constant 0 : i32
    return %arg0, %c0_i32 : i32, i32
  }
  func.func @transform_2(%arg0: i32) -> (i32, i32) {
    %c0_i32 = arith.constant 0 : i32
    %c0_i32_0 = arith.constant 0 : i32
    %c0_i32_1 = arith.constant 0 : i32
    return %c0_i32, %c0_i32_0 : i32, i32
  }
  func.func @transform_3(%arg0: i32) -> (i32, i32) {
    %c0_i32 = arith.constant 0 : i32
    %c0_i32_0 = arith.constant 0 : i32
    %c0_i32_1 = arith.constant 0 : i32
    return %c0_i32, %c0_i32_0 : i32, i32
  }
  func.func @transform_4(%arg0: i32) -> (i32, i32) {
    %c0_i32 = arith.constant 0 : i32
    %c0_i32_0 = arith.constant 0 : i32
    %c0_i32_1 = arith.constant 0 : i32
    return %c0_i32, %c0_i32_0 : i32, i32
  }
  func.func @transform_5(%arg0: i32) -> (i32, i32) {
    %c0_i32 = arith.constant 0 : i32
    %c0_i32_0 = arith.constant 0 : i32
    %c0_i32_1 = arith.constant 0 : i32
    return %c0_i32, %c0_i32_0 : i32, i32
  }
  func.func @transform_6(%arg0: i32) -> (i32, i32) {
    %c0_i32 = arith.constant 0 : i32
    %c0_i32_0 = arith.constant 0 : i32
    %c0_i32_1 = arith.constant 0 : i32
    return %c0_i32, %c0_i32_0 : i32, i32
  }
  func.func @transform_7(%arg0: i32) -> (i32, i32) {
    %c0_i32 = arith.constant 0 : i32
    %c0_i32_0 = arith.constant 0 : i32
    %c0_i32_1 = arith.constant 0 : i32
    return %c0_i32, %c0_i32_0 : i32, i32
  }
  func.func @transform_8(%arg0: i32) -> (i32, i32) {
    %c0_i32 = arith.constant 0 : i32
    %c0_i32_0 = arith.constant 0 : i32
    %c0_i32_1 = arith.constant 0 : i32
    return %c0_i32, %c0_i32_0 : i32, i32
  }
  func.func @transform_9(%arg0: i32) -> (i32, i32) {
    %c0_i32 = arith.constant 0 : i32
    %c0_i32_0 = arith.constant 0 : i32
    %c0_i32_1 = arith.constant 0 : i32
    return %c0_i32, %c0_i32_0 : i32, i32
  }
  func.func @transform_10(%arg0: i32) -> (i32, i32) {
    %c0_i32 = arith.constant 0 : i32
    %c0_i32_0 = arith.constant 0 : i32
    %c0_i32_1 = arith.constant 0 : i32
    return %c0_i32, %c0_i32_0 : i32, i32
  }
  func.func @transform_11(%arg0: i32) -> (i32, i32) {
    %c0_i32 = arith.constant 0 : i32
    %c0_i32_0 = arith.constant 0 : i32
    %c0_i32_1 = arith.constant 0 : i32
    return %c0_i32, %c0_i32_0 : i32, i32
  }
  func.func @transform_12(%arg0: i32) -> (i32, i32) {
    %c0_i32 = arith.constant 0 : i32
    %c0_i32_0 = arith.constant 0 : i32
    %c0_i32_1 = arith.constant 0 : i32
    return %c0_i32, %c0_i32_0 : i32, i32
  }
  func.func @transform_13(%arg0: i32) -> (i32, i32) {
    %c0_i32 = arith.constant 0 : i32
    %c0_i32_0 = arith.constant 0 : i32
    %c0_i32_1 = arith.constant 0 : i32
    return %c0_i32, %c0_i32_0 : i32, i32
  }
  func.func @transform_14(%arg0: i32) -> (i32, i32) {
    %c0_i32 = arith.constant 0 : i32
    %c0_i32_0 = arith.constant 0 : i32
    return %arg0, %c0_i32 : i32, i32
  }
}

</mosaic_0001>

<llo_original>
// kernel: tpu_custom_call.1
$region0: #{tpu_custom_call.1}
  #allocation0 [shape = 'u32[]', space=smem, size = 0x4, offset = 0x4, fixed_abs, tag = 'smem constant byte address 0x4 - core index']
  #allocation1 [shape = 'u32[144,128]{1,0:T(1,128)}', space=vmem, size = 0x12000, scoped, tag = 'internal scratch']
  #allocation2 [shape = 'f32[1,1]{1,0:T(1,128)S(1)}', space=vmem, size = 0x200, scoped, tag = 'scoped memory for tpu_custom_call.1']
  %s0 = inlined_call_operand.vmem [shape: bf16[224,200], index: 0, kind: input, shape index: {}]
  %s1 = inlined_call_operand.vmem [shape: bf16[224,200], index: 1, kind: input, shape index: {}]
  %s2 = inlined_call_operand.vmem [shape: f32[200,64], index: 2, kind: input, shape index: {}]
  %s3 = inlined_call_operand.vmem [shape: f32[200,64], index: 3, kind: input, shape index: {}]
  %s4 = inlined_call_operand.vmem [shape: f32[1,64], index: 4, kind: input, shape index: {}]
  %s5 = inlined_call_operand.vmem [shape: f32[64,32], index: 5, kind: input, shape index: {}]
  %s6 = inlined_call_operand.vmem [shape: f32[1,32], index: 6, kind: input, shape index: {}]
  %s7 = inlined_call_operand.vmem [shape: f32[32,16], index: 7, kind: input, shape index: {}]
  %s8 = inlined_call_operand.vmem [shape: f32[1,16], index: 8, kind: input, shape index: {}]
  %s9 = inlined_call_operand.vmem [shape: f32[16,100], index: 9, kind: input, shape index: {}]
  %s10 = inlined_call_operand.vmem [shape: f32[1,100], index: 10, kind: input, shape index: {}]
  %s11 = inlined_call_operand.vmem [shape: f32[1,200], index: 11, kind: input, shape index: {}]
  %s12 = inlined_call_operand.vmem [shape: f32[1,100], index: 12, kind: input, shape index: {}]
  %s13 = inlined_call_operand.<no memory space> [shape: f32[1,1], index: 13, kind: input, shape index: {}]
  %s14 = inlined_call_operand.vmem [shape: f32[224,1], index: 14, kind: output, shape index: {}]
  %s15 = sld [smem:[#allocation0]]
  $region89: #{tpu_custom_call.1} parent=0
    _
  %s17 = ssub.s32 1, %s15
  %s18 = scalar_select 0, %s17, %s15
  %v19 = vstv %s13
  %20 = vst [vmem:[#allocation2] sm:$0x1] %v19
  loop: start=0, step=1, limit=4
  $region2: #{tpu_custom_call.1} parent=0 // loop_pre_header
    _
  $region3: #{tpu_custom_call.1} parent=0 // loop_header
    %s22 = sphi 0, %s26
    %p23 = scmp.ge.s32.totalorder %s22, 4
    %s32 = sphi 0, %s34
    %s35 = sphi 0, %s32
    %s36 = sphi 0, %s35
    %s52 = sphi 0, %s36
    %s58 = sphi 0, %s60
    %s61 = sphi 0, %s58
    %s62 = sphi 0, %s61
    %s78 = sphi 0, %s62
    %s82 = sphi 0, %s82
    %s84 = sphi 0, %s82
    %s85 = sphi 0, %s84
    %s99 = sphi 0, %s85
    %s103 = sphi 0, %s103
    %s105 = sphi 0, %s103
    %s106 = sphi 0, %s105
    %s120 = sphi 0, %s106
    %s124 = sphi 0, %s124
    %s126 = sphi 0, %s124
    %s127 = sphi 0, %s126
    %s141 = sphi 0, %s127
    %s145 = sphi 0, %s145
    %s147 = sphi 0, %s145
    %s148 = sphi 0, %s147
    %s162 = sphi 0, %s148
    %s166 = sphi 0, %s166
    %s168 = sphi 0, %s166
    %s169 = sphi 0, %s168
    %s183 = sphi 0, %s169
    %s187 = sphi 0, %s187
    %s189 = sphi 0, %s187
    %s190 = sphi 0, %s189
    %s204 = sphi 0, %s190
    %s208 = sphi 0, %s208
    %s210 = sphi 0, %s208
    %s211 = sphi 0, %s210
    %s225 = sphi 0, %s211
    %s229 = sphi 0, %s229
    %s231 = sphi 0, %s229
    %s232 = sphi 0, %s231
    %s246 = sphi 0, %s232
    %s250 = sphi 0, %s250
    %s252 = sphi 0, %s250
    %s253 = sphi 0, %s252
    %s267 = sphi 0, %s253
    %s271 = sphi 0, %s271
    %s273 = sphi 0, %s271
    %s274 = sphi 0, %s273
    %s288 = sphi 0, %s274
    %s292 = sphi 0, %s292
    %s294 = sphi 0, %s292
    %s295 = sphi 0, %s294
    %s309 = sphi 0, %s295
    %s313 = sphi 0, %s313
    %s315 = sphi 0, %s313
    %s316 = sphi 0, %s315
    %s330 = sphi 0, %s316
    %s336 = sphi 0, %s338
    %s339 = sphi 0, %s336
    %s340 = sphi 0, %s339
    %s356 = sphi 0, %s340
  $region4: #{tpu_custom_call.1} parent=0 // loop_header_branch
    %25 = sbr.rel (%p23) target = $region8
  $region5: #{tpu_custom_call.1} parent=0 // loop_body
    %s27 = ssub.s32 %s22, 1
    %s28 = ssub.s32 %s22, 2
    %s29 = sadd.s32 %s22, 1
    %s30 = ssub.s32 %s22, %s29
    %p31 = scmp.eq.s32.totalorder %s30, 0
    %s33 = sadd.s32 %s32, 1
    %s34 = scalar_select %p31, %s32, %s33
    %p37 = pneg %p31
    %p38 = scmp.eq.s32.totalorder %s22, 1
    %p39 = por %p37, %p38
    %p40 = scmp.ne.s32.totalorder %s32, %s35
    %p41 = scmp.eq.s32.totalorder %s22, 0
    %p42 = por %p40, %p41
    %p43 = scmp.ne.s32.totalorder %s32, %s35
    %p44 = scmp.eq.s32.totalorder %s27, 1
    %p45 = por %p43, %p44
    %p46 = scmp.ne.s32.totalorder %s35, %s36
    %p47 = scmp.eq.s32.totalorder %s27, 0
    %p48 = por %p46, %p47
    %p49 = scmp.ne.s32.totalorder %s35, %s36
    %p50 = scmp.eq.s32.totalorder %s28, 1
    %p51 = por %p49, %p50
    %p53 = scmp.ne.s32.totalorder %s36, %s52
    %p54 = scmp.eq.s32.totalorder %s28, 0
    %p55 = por %p53, %p54
    %s56 = ssub.s32 %s22, %s29
    %p57 = scmp.eq.s32.totalorder %s56, 0
    %s59 = sadd.s32 %s58, 1
    %s60 = scalar_select %p57, %s58, %s59
    %p63 = pneg %p57
    %p64 = scmp.eq.s32.totalorder %s22, 1
    %p65 = por %p63, %p64
    %p66 = scmp.ne.s32.totalorder %s58, %s61
    %p67 = scmp.eq.s32.totalorder %s22, 0
    %p68 = por %p66, %p67
    %p69 = scmp.ne.s32.totalorder %s58, %s61
    %p70 = scmp.eq.s32.totalorder %s27, 1
    %p71 = por %p69, %p70
    %p72 = scmp.ne.s32.totalorder %s61, %s62
    %p73 = scmp.eq.s32.totalorder %s27, 0
    %p74 = por %p72, %p73
    %p75 = scmp.ne.s32.totalorder %s61, %s62
    %p76 = scmp.eq.s32.totalorder %s28, 1
    %p77 = por %p75, %p76
    %p79 = scmp.ne.s32.totalorder %s62, %s78
    %p80 = scmp.eq.s32.totalorder %s28, 0
    %p81 = por %p79, %p80
    %s83 = sadd.s32 %s82, 1
    %p86 = scmp.eq.s32.totalorder %s22, 1
    %p87 = scmp.ne.s32.totalorder %s82, %s84
    %p88 = scmp.eq.s32.totalorder %s22, 0
    %p89 = por %p87, %p88
    %p90 = scmp.ne.s32.totalorder %s82, %s84
    %p91 = scmp.eq.s32.totalorder %s27, 1
    %p92 = por %p90, %p91
    %p93 = scmp.ne.s32.totalorder %s84, %s85
    %p94 = scmp.eq.s32.totalorder %s27, 0
    %p95 = por %p93, %p94
    %p96 = scmp.ne.s32.totalorder %s84, %s85
    %p97 = scmp.eq.s32.totalorder %s28, 1
    %p98 = por %p96, %p97
    %p100 = scmp.ne.s32.totalorder %s85, %s99
    %p101 = scmp.eq.s32.totalorder %s28, 0
    %p102 = por %p100, %p101
    %s104 = sadd.s32 %s103, 1
    %p107 = scmp.eq.s32.totalorder %s22, 1
    %p108 = scmp.ne.s32.totalorder %s103, %s105
    %p109 = scmp.eq.s32.totalorder %s22, 0
    %p110 = por %p108, %p109
    %p111 = scmp.ne.s32.totalorder %s103, %s105
    %p112 = scmp.eq.s32.totalorder %s27, 1
    %p113 = por %p111, %p112
    %p114 = scmp.ne.s32.totalorder %s105, %s106
    %p115 = scmp.eq.s32.totalorder %s27, 0
    %p116 = por %p114, %p115
    %p117 = scmp.ne.s32.totalorder %s105, %s106
    %p118 = scmp.eq.s32.totalorder %s28, 1
    %p119 = por %p117, %p118
    %p121 = scmp.ne.s32.totalorder %s106, %s120
    %p122 = scmp.eq.s32.totalorder %s28, 0
    %p123 = por %p121, %p122
    %s125 = sadd.s32 %s124, 1
    %p128 = scmp.eq.s32.totalorder %s22, 1
    %p129 = scmp.ne.s32.totalorder %s124, %s126
    %p130 = scmp.eq.s32.totalorder %s22, 0
    %p131 = por %p129, %p130
    %p132 = scmp.ne.s32.totalorder %s124, %s126
    %p133 = scmp.eq.s32.totalorder %s27, 1
    %p134 = por %p132, %p133
    %p135 = scmp.ne.s32.totalorder %s126, %s127
    %p136 = scmp.eq.s32.totalorder %s27, 0
    %p137 = por %p135, %p136
    %p138 = scmp.ne.s32.totalorder %s126, %s127
    %p139 = scmp.eq.s32.totalorder %s28, 1
    %p140 = por %p138, %p139
    %p142 = scmp.ne.s32.totalorder %s127, %s141
    %p143 = scmp.eq.s32.totalorder %s28, 0
    %p144 = por %p142, %p143
    %s146 = sadd.s32 %s145, 1
    %p149 = scmp.eq.s32.totalorder %s22, 1
    %p150 = scmp.ne.s32.totalorder %s145, %s147
    %p151 = scmp.eq.s32.totalorder %s22, 0
    %p152 = por %p150, %p151
    %p153 = scmp.ne.s32.totalorder %s145, %s147
    %p154 = scmp.eq.s32.totalorder %s27, 1
    %p155 = por %p153, %p154
    %p156 = scmp.ne.s32.totalorder %s147, %s148
    %p157 = scmp.eq.s32.totalorder %s27, 0
    %p158 = por %p156, %p157
    %p159 = scmp.ne.s32.totalorder %s147, %s148
    %p160 = scmp.eq.s32.totalorder %s28, 1
    %p161 = por %p159, %p160
    %p163 = scmp.ne.s32.totalorder %s148, %s162
    %p164 = scmp.eq.s32.totalorder %s28, 0
    %p165 = por %p163, %p164
    %s167 = sadd.s32 %s166, 1
    %p170 = scmp.eq.s32.totalorder %s22, 1
    %p171 = scmp.ne.s32.totalorder %s166, %s168
    %p172 = scmp.eq.s32.totalorder %s22, 0
    %p173 = por %p171, %p172
    %p174 = scmp.ne.s32.totalorder %s166, %s168
    %p175 = scmp.eq.s32.totalorder %s27, 1
    %p176 = por %p174, %p175
    %p177 = scmp.ne.s32.totalorder %s168, %s169
    %p178 = scmp.eq.s32.totalorder %s27, 0
    %p179 = por %p177, %p178
    %p180 = scmp.ne.s32.totalorder %s168, %s169
    %p181 = scmp.eq.s32.totalorder %s28, 1
    %p182 = por %p180, %p181
    %p184 = scmp.ne.s32.totalorder %s169, %s183
    %p185 = scmp.eq.s32.totalorder %s28, 0
    %p186 = por %p184, %p185
    %s188 = sadd.s32 %s187, 1
    %p191 = scmp.eq.s32.totalorder %s22, 1
    %p192 = scmp.ne.s32.totalorder %s187, %s189
    %p193 = scmp.eq.s32.totalorder %s22, 0
    %p194 = por %p192, %p193
    %p195 = scmp.ne.s32.totalorder %s187, %s189
    %p196 = scmp.eq.s32.totalorder %s27, 1
    %p197 = por %p195, %p196
    %p198 = scmp.ne.s32.totalorder %s189, %s190
    %p199 = scmp.eq.s32.totalorder %s27, 0
    %p200 = por %p198, %p199
    %p201 = scmp.ne.s32.totalorder %s189, %s190
    %p202 = scmp.eq.s32.totalorder %s28, 1
    %p203 = por %p201, %p202
    %p205 = scmp.ne.s32.totalorder %s190, %s204
    %p206 = scmp.eq.s32.totalorder %s28, 0
    %p207 = por %p205, %p206
    %s209 = sadd.s32 %s208, 1
    %p212 = scmp.eq.s32.totalorder %s22, 1
    %p213 = scmp.ne.s32.totalorder %s208, %s210
    %p214 = scmp.eq.s32.totalorder %s22, 0
    %p215 = por %p213, %p214
    %p216 = scmp.ne.s32.totalorder %s208, %s210
    %p217 = scmp.eq.s32.totalorder %s27, 1
    %p218 = por %p216, %p217
    %p219 = scmp.ne.s32.totalorder %s210, %s211
    %p220 = scmp.eq.s32.totalorder %s27, 0
    %p221 = por %p219, %p220
    %p222 = scmp.ne.s32.totalorder %s210, %s211
    %p223 = scmp.eq.s32.totalorder %s28, 1
    %p224 = por %p222, %p223
    %p226 = scmp.ne.s32.totalorder %s211, %s225
    %p227 = scmp.eq.s32.totalorder %s28, 0
    %p228 = por %p226, %p227
    %s230 = sadd.s32 %s229, 1
    %p233 = scmp.eq.s32.totalorder %s22, 1
    %p234 = scmp.ne.s32.totalorder %s229, %s231
    %p235 = scmp.eq.s32.totalorder %s22, 0
    %p236 = por %p234, %p235
    %p237 = scmp.ne.s32.totalorder %s229, %s231
    %p238 = scmp.eq.s32.totalorder %s27, 1
    %p239 = por %p237, %p238
    %p240 = scmp.ne.s32.totalorder %s231, %s232
    %p241 = scmp.eq.s32.totalorder %s27, 0
    %p242 = por %p240, %p241
    %p243 = scmp.ne.s32.totalorder %s231, %s232
    %p244 = scmp.eq.s32.totalorder %s28, 1
    %p245 = por %p243, %p244
    %p247 = scmp.ne.s32.totalorder %s232, %s246
    %p248 = scmp.eq.s32.totalorder %s28, 0
    %p249 = por %p247, %p248
    %s251 = sadd.s32 %s250, 1
    %p254 = scmp.eq.s32.totalorder %s22, 1
    %p255 = scmp.ne.s32.totalorder %s250, %s252
    %p256 = scmp.eq.s32.totalorder %s22, 0
    %p257 = por %p255, %p256
    %p258 = scmp.ne.s32.totalorder %s250, %s252
    %p259 = scmp.eq.s32.totalorder %s27, 1
    %p260 = por %p258, %p259
    %p261 = scmp.ne.s32.totalorder %s252, %s253
    %p262 = scmp.eq.s32.totalorder %s27, 0
    %p263 = por %p261, %p262
    %p264 = scmp.ne.s32.totalorder %s252, %s253
    %p265 = scmp.eq.s32.totalorder %s28, 1
    %p266 = por %p264, %p265
    %p268 = scmp.ne.s32.totalorder %s253, %s267
    %p269 = scmp.eq.s32.totalorder %s28, 0
    %p270 = por %p268, %p269
    %s272 = sadd.s32 %s271, 1
    %p275 = scmp.eq.s32.totalorder %s22, 1
    %p276 = scmp.ne.s32.totalorder %s271, %s273
    %p277 = scmp.eq.s32.totalorder %s22, 0
    %p278 = por %p276, %p277
    %p279 = scmp.ne.s32.totalorder %s271, %s273
    %p280 = scmp.eq.s32.totalorder %s27, 1
    %p281 = por %p279, %p280
    %p282 = scmp.ne.s32.totalorder %s273, %s274
    %p283 = scmp.eq.s32.totalorder %s27, 0
    %p284 = por %p282, %p283
    %p285 = scmp.ne.s32.totalorder %s273, %s274
    %p286 = scmp.eq.s32.totalorder %s28, 1
    %p287 = por %p285, %p286
    %p289 = scmp.ne.s32.totalorder %s274, %s288
    %p290 = scmp.eq.s32.totalorder %s28, 0
    %p291 = por %p289, %p290
    %s293 = sadd.s32 %s292, 1
    %p296 = scmp.eq.s32.totalorder %s22, 1
    %p297 = scmp.ne.s32.totalorder %s292, %s294
    %p298 = scmp.eq.s32.totalorder %s22, 0
    %p299 = por %p297, %p298
    %p300 = scmp.ne.s32.totalorder %s292, %s294
    %p301 = scmp.eq.s32.totalorder %s27, 1
    %p302 = por %p300, %p301
    %p303 = scmp.ne.s32.totalorder %s294, %s295
    %p304 = scmp.eq.s32.totalorder %s27, 0
    %p305 = por %p303, %p304
    %p306 = scmp.ne.s32.totalorder %s294, %s295
    %p307 = scmp.eq.s32.totalorder %s28, 1
    %p308 = por %p306, %p307
    %p310 = scmp.ne.s32.totalorder %s295, %s309
    %p311 = scmp.eq.s32.totalorder %s28, 0
    %p312 = por %p310, %p311
    %s314 = sadd.s32 %s313, 1
    %p317 = scmp.eq.s32.totalorder %s22, 1
    %p318 = scmp.ne.s32.totalorder %s313, %s315
    %p319 = scmp.eq.s32.totalorder %s22, 0
    %p320 = por %p318, %p319
    %p321 = scmp.ne.s32.totalorder %s313, %s315
    %p322 = scmp.eq.s32.totalorder %s27, 1
    %p323 = por %p321, %p322
    %p324 = scmp.ne.s32.totalorder %s315, %s316
    %p325 = scmp.eq.s32.totalorder %s27, 0
    %p326 = por %p324, %p325
    %p327 = scmp.ne.s32.totalorder %s315, %s316
    %p328 = scmp.eq.s32.totalorder %s28, 1
    %p329 = por %p327, %p328
    %p331 = scmp.ne.s32.totalorder %s316, %s330
    %p332 = scmp.eq.s32.totalorder %s28, 0
    %p333 = por %p331, %p332
    %s334 = ssub.s32 %s22, %s29
    %p335 = scmp.eq.s32.totalorder %s334, 0
    %s337 = sadd.s32 %s336, 1
    %s338 = scalar_select %p335, %s336, %s337
    %p341 = pneg %p335
    %p342 = scmp.eq.s32.totalorder %s22, 1
    %p343 = por %p341, %p342
    %p344 = scmp.ne.s32.totalorder %s336, %s339
    %p345 = scmp.eq.s32.totalorder %s22, 0
    %p346 = por %p344, %p345
    %p347 = scmp.ne.s32.totalorder %s336, %s339
    %p348 = scmp.eq.s32.totalorder %s27, 1
    %p349 = por %p347, %p348
    %p350 = scmp.ne.s32.totalorder %s339, %s340
    %p351 = scmp.eq.s32.totalorder %s27, 0
    %p352 = por %p350, %p351
    %p353 = scmp.ne.s32.totalorder %s339, %s340
    %p354 = scmp.eq.s32.totalorder %s28, 1
    %p355 = por %p353, %p354
    %p357 = scmp.ne.s32.totalorder %s340, %s356
    %p358 = scmp.eq.s32.totalorder %s28, 0
    %p359 = por %p357, %p358
    %p360 = scmp.le.s32.totalorder 1, %s22
    %p361 = scmp.lt.s32.totalorder %s22, 3
    %p362 = pnand %p360, %p361
    %p363 = pneg %p362
    // Predicated region
    $region9: #{tpu_custom_call.1} parent=5 // pred_check
      _
    $region10: #{tpu_custom_call.1} parent=5 // pred_check_branch
      %365 = sbr.rel (%p362) target = $region12
    $region11: #{tpu_custom_call.1} parent=5 // pred_region
      %s366 = ssub.s32 %s22, 1
      // Predicated region
      $region13: #{tpu_custom_call.1} parent=11 // pred_check
        %p367 = pneg %p95
      $region14: #{tpu_custom_call.1} parent=11 // pred_check_branch
        %369 = sbr.rel (%p367) target = $region16
      $region15: #{tpu_custom_call.1} parent=11 // pred_region
        _
      $region16: #{tpu_custom_call.1} parent=11 // pred_fallthru
        _
      // Predicated region
      $region17: #{tpu_custom_call.1} parent=11 // pred_check
        %p370 = pneg %p116
      $region18: #{tpu_custom_call.1} parent=11 // pred_check_branch
        %372 = sbr.rel (%p370) target = $region20
      $region19: #{tpu_custom_call.1} parent=11 // pred_region
        _
      $region20: #{tpu_custom_call.1} parent=11 // pred_fallthru
        _
      // Predicated region
      $region21: #{tpu_custom_call.1} parent=11 // pred_check
        %p373 = pneg %p137
      $region22: #{tpu_custom_call.1} parent=11 // pred_check_branch
        %375 = sbr.rel (%p373) target = $region24
      $region23: #{tpu_custom_call.1} parent=11 // pred_region
        _
      $region24: #{tpu_custom_call.1} parent=11 // pred_fallthru
        _
      // Predicated region
      $region25: #{tpu_custom_call.1} parent=11 // pred_check
        %p376 = pneg %p158
      $region26: #{tpu_custom_call.1} parent=11 // pred_check_branch
        %378 = sbr.rel (%p376) target = $region28
      $region27: #{tpu_custom_call.1} parent=11 // pred_region
        _
      $region28: #{tpu_custom_call.1} parent=11 // pred_fallthru
        _
      // Predicated region
      $region29: #{tpu_custom_call.1} parent=11 // pred_check
        %p379 = pneg %p179
      $region30: #{tpu_custom_call.1} parent=11 // pred_check_branch
        %381 = sbr.rel (%p379) target = $region32
      $region31: #{tpu_custom_call.1} parent=11 // pred_region
        _
      $region32: #{tpu_custom_call.1} parent=11 // pred_fallthru
        _
      // Predicated region
      $region33: #{tpu_custom_call.1} parent=11 // pred_check
        %p382 = pneg %p200
      $region34: #{tpu_custom_call.1} parent=11 // pred_check_branch
        %384 = sbr.rel (%p382) target = $region36
      $region35: #{tpu_custom_call.1} parent=11 // pred_region
        _
      $region36: #{tpu_custom_call.1} parent=11 // pred_fallthru
        _
      // Predicated region
      $region37: #{tpu_custom_call.1} parent=11 // pred_check
        %p385 = pneg %p221
      $region38: #{tpu_custom_call.1} parent=11 // pred_check_branch
        %387 = sbr.rel (%p385) target = $region40
      $region39: #{tpu_custom_call.1} parent=11 // pred_region
        _
      $region40: #{tpu_custom_call.1} parent=11 // pred_fallthru
        _
      // Predicated region
      $region41: #{tpu_custom_call.1} parent=11 // pred_check
        %p388 = pneg %p242
      $region42: #{tpu_custom_call.1} parent=11 // pred_check_branch
        %390 = sbr.rel (%p388) target = $region44
      $region43: #{tpu_custom_call.1} parent=11 // pred_region
        _
      $region44: #{tpu_custom_call.1} parent=11 // pred_fallthru
        _
      // Predicated region
      $region45: #{tpu_custom_call.1} parent=11 // pred_check
        %p391 = pneg %p263
      $region46: #{tpu_custom_call.1} parent=11 // pred_check_branch
        %393 = sbr.rel (%p391) target = $region48
      $region47: #{tpu_custom_call.1} parent=11 // pred_region
        _
      $region48: #{tpu_custom_call.1} parent=11 // pred_fallthru
        _
      // Predicated region
      $region49: #{tpu_custom_call.1} parent=11 // pred_check
        %p394 = pneg %p284
      $region50: #{tpu_custom_call.1} parent=11 // pred_check_branch
        %396 = sbr.rel (%p394) target = $region52
      $region51: #{tpu_custom_call.1} parent=11 // pred_region
        _
      $region52: #{tpu_custom_call.1} parent=11 // pred_fallthru
        _
      // Predicated region
      $region53: #{tpu_custom_call.1} parent=11 // pred_check
        %p397 = pneg %p305
      $region54: #{tpu_custom_call.1} parent=11 // pred_check_branch
        %399 = sbr.rel (%p397) target = $region56
      $region55: #{tpu_custom_call.1} parent=11 // pred_region
        _
      $region56: #{tpu_custom_call.1} parent=11 // pred_fallthru
        _
      // Predicated region
      $region57: #{tpu_custom_call.1} parent=11 // pred_check
        %p400 = pneg %p326
      $region58: #{tpu_custom_call.1} parent=11 // pred_check_branch
        %402 = sbr.rel (%p400) target = $region60
      $region59: #{tpu_custom_call.1} parent=11 // pred_region
        _
      $region60: #{tpu_custom_call.1} parent=11 // pred_fallthru
        _
    $region12: #{tpu_custom_call.1} parent=5 // pred_fallthru
      _
    %p403 = scmp.lt.s32.totalorder %s22, 2
    // Predicated region
    $region61: #{tpu_custom_call.1} parent=5 // pred_check
      %p404 = pneg %p403
    $region62: #{tpu_custom_call.1} parent=5 // pred_check_branch
      %406 = sbr.rel (%p404) target = $region64
    $region63: #{tpu_custom_call.1} parent=5 // pred_region
      // Predicated region
      $region65: #{tpu_custom_call.1} parent=63 // pred_check
        %p407 = pneg %p42
      $region66: #{tpu_custom_call.1} parent=63 // pred_check_branch
        %409 = sbr.rel (%p407) target = $region68
      $region67: #{tpu_custom_call.1} parent=63 // pred_region
        %s410 = smul.u32 14, %s22
        %p411 = scmp.lt.s32.totalorder %s410, 27
        %s412 = scalar_select %p411, %s410, 27
        %s413 = smul.addr %s412, 2
        %s414 = smul.addr %s413, 4
        %s415 = scalar_lea.vmem %s0, %s414
        %s416 = smul.u32 14, %s22
      $region68: #{tpu_custom_call.1} parent=63 // pred_fallthru
        _
      // Predicated region
      $region69: #{tpu_custom_call.1} parent=63 // pred_check
        %p417 = pneg %p68
      $region70: #{tpu_custom_call.1} parent=63 // pred_check_branch
        %419 = sbr.rel (%p417) target = $region72
      $region71: #{tpu_custom_call.1} parent=63 // pred_region
        %s420 = smul.u32 14, %s22
        %p421 = scmp.lt.s32.totalorder %s420, 27
        %s422 = scalar_select %p421, %s420, 27
        %s423 = smul.addr %s422, 2
        %s424 = smul.addr %s423, 4
        %s425 = scalar_lea.vmem %s1, %s424
        %s426 = smul.u32 14, %s22
      $region72: #{tpu_custom_call.1} parent=63 // pred_fallthru
        _
    $region64: #{tpu_custom_call.1} parent=5 // pred_fallthru
      _
    %p427 = scmp.le.s32.totalorder 1, %s22
    %p428 = scmp.lt.s32.totalorder %s22, 3
    %p429 = pnand %p427, %p428
    %p430 = pneg %p429
    // Predicated region
    $region73: #{tpu_custom_call.1} parent=5 // pred_check
      _
    $region74: #{tpu_custom_call.1} parent=5 // pred_check_branch
      %432 = sbr.rel (%p429) target = $region76
    $region75: #{tpu_custom_call.1} parent=5 // pred_region
      %s433 = ssub.s32 %s22, 1
      %s434 = smul.u32 14, %s27
      %p435 = scmp.lt.s32.totalorder %s434, 27
      %s436 = scalar_select %p435, %s434, 27
      %s437 = smul.addr %s436, 2
      %s438 = smul.addr %s437, 4
      %s439 = scalar_lea.vmem %s0, %s438
      %p440 = pneg %p48
      %p441 = pneg %p45
      %s442 = smul.u32 14, %s27
      %p443 = scmp.lt.s32.totalorder %s442, 27
      %s444 = scalar_select %p443, %s442, 27
      %s445 = smul.addr %s444, 2
      %s446 = smul.addr %s445, 4
      %s447 = scalar_lea.vmem %s1, %s446
      %p448 = pneg %p74
      %p449 = pneg %p71
      %p450 = pneg %p95
      %p451 = pneg %p92
      %p452 = pneg %p116
      %p453 = pneg %p113
      %p454 = pneg %p137
      %p455 = pneg %p134
      %p456 = pneg %p158
      %p457 = pneg %p155
      %p458 = pneg %p179
      %p459 = pneg %p176
      %p460 = pneg %p200
      %p461 = pneg %p197
      %p462 = pneg %p221
      %p463 = pneg %p218
      %p464 = pneg %p242
      %p465 = pneg %p239
      %p466 = pneg %p263
      %p467 = pneg %p260
      %p468 = pneg %p284
      %p469 = pneg %p281
      %p470 = pneg %p305
      %p471 = pneg %p302
      %p472 = pneg %p326
      %p473 = pneg %p323
      %p474 = pneg %p352
      %p475 = pneg %p349
      %s476 = smul.u32 14, %s27
      %p477 = scmp.lt.s32.totalorder %s476, 27
      %s478 = scalar_select %p477, %s476, 27
      %s479 = smul.addr %s478, 8
      %s480 = scalar_lea.vmem %s14, %s479
      %s481 = smul.u32 14, %s27
      %p482 = scmp.lt.s32.totalorder %s481, 27
      %s483 = scalar_select %p482, %s481, 27
      %s484 = smul.addr %s483, 2
      %s485 = smul.addr %s484, 4
      %s486 = scalar_lea.vmem %s0, %s485
      %s487 = smul.u32 14, %s27
      %s488 = smul.u32 14, %s27
      %p489 = scmp.lt.s32.totalorder %s488, 27
      %s490 = scalar_select %p489, %s488, 27
      %s491 = smul.addr %s490, 2
      %s492 = smul.addr %s491, 4
      %s493 = scalar_lea.vmem %s1, %s492
      %s494 = smul.u32 14, %s27
      %s495 = smul.u32 14, %s27
      %p496 = scmp.lt.s32.totalorder %s495, 27
      %s497 = scalar_select %p496, %s495, 27
      %s498 = smul.addr %s497, 8
      %s499 = scalar_lea.vmem %s14, %s498
      %s500 = smul.u32 14, %s27
      %v501 = vld [vmem:[%s486] sm:$0xff]
      %v502 = vld [vmem:[%s486 + $0x8] sm:$0xff]
      %v503 = vld [vmem:[%s486 + $0x10] sm:$0xff]
      %v504 = vld [vmem:[%s486 + $0x18] sm:$0xff]
      %v505 = vld [vmem:[%s486 + $0x20] sm:$0xff]
      %v506 = vld [vmem:[%s486 + $0x28] sm:$0xff]
      %v507 = vld [vmem:[%s486 + $0x30] sm:$0xff]
      %v508 = vld [vmem:[%s486 + $0x38] sm:$0xff]
      %v509 = vld [vmem:[%s486 + $0x40] sm:$0xff]
      %v510 = vld [vmem:[%s486 + $0x48] sm:$0xff]
      %v511 = vld [vmem:[%s486 + $0x50] sm:$0xff]
      %v512 = vld [vmem:[%s486 + $0x58] sm:$0xff]
      %v513 = vld [vmem:[%s486 + $0x60] sm:$0xff]
      %v514 = vld [vmem:[%s486 + $0x68] sm:$0xff]
      %v515 = vunpack.c.l.bf16 %v501
      %v516 = vunpack.c.h.bf16 %v501
      %v517 = vunpack.c.l.bf16 %v502
      %v518 = vunpack.c.h.bf16 %v502
      %v519 = vunpack.c.l.bf16 %v503
      %v520 = vunpack.c.h.bf16 %v503
      %v521 = vunpack.c.l.bf16 %v504
      %v522 = vunpack.c.h.bf16 %v504
      %v523 = vunpack.c.l.bf16 %v505
      %v524 = vunpack.c.h.bf16 %v505
      %v525 = vunpack.c.l.bf16 %v506
      %v526 = vunpack.c.h.bf16 %v506
      %v527 = vunpack.c.l.bf16 %v507
      %v528 = vunpack.c.h.bf16 %v507
      %v529 = vunpack.c.l.bf16 %v508
      %v530 = vunpack.c.h.bf16 %v508
      %v531 = vunpack.c.l.bf16 %v509
      %v532 = vunpack.c.h.bf16 %v509
      %v533 = vunpack.c.l.bf16 %v510
      %v534 = vunpack.c.h.bf16 %v510
      %v535 = vunpack.c.l.bf16 %v511
      %v536 = vunpack.c.h.bf16 %v511
      %v537 = vunpack.c.l.bf16 %v512
      %v538 = vunpack.c.h.bf16 %v512
      %v539 = vunpack.c.l.bf16 %v513
      %v540 = vunpack.c.h.bf16 %v513
      %v541 = vunpack.c.l.bf16 %v514
      %v542 = vunpack.c.h.bf16 %v514
      %v543 = vld [vmem:[%s493] sm:$0xff]
      %v544 = vld [vmem:[%s493 + $0x8] sm:$0xff]
      %v545 = vld [vmem:[%s493 + $0x10] sm:$0xff]
      %v546 = vld [vmem:[%s493 + $0x18] sm:$0xff]
      %v547 = vld [vmem:[%s493 + $0x20] sm:$0xff]
      %v548 = vld [vmem:[%s493 + $0x28] sm:$0xff]
      %v549 = vld [vmem:[%s493 + $0x30] sm:$0xff]
      %v550 = vld [vmem:[%s493 + $0x38] sm:$0xff]
      %v551 = vld [vmem:[%s493 + $0x40] sm:$0xff]
      %v552 = vld [vmem:[%s493 + $0x48] sm:$0xff]
      %v553 = vld [vmem:[%s493 + $0x50] sm:$0xff]
      %v554 = vld [vmem:[%s493 + $0x58] sm:$0xff]
      %v555 = vld [vmem:[%s493 + $0x60] sm:$0xff]
      %v556 = vld [vmem:[%s493 + $0x68] sm:$0xff]
      %v557 = vunpack.c.l.bf16 %v543
      %v558 = vunpack.c.h.bf16 %v543
      %v559 = vunpack.c.l.bf16 %v544
      %v560 = vunpack.c.h.bf16 %v544
      %v561 = vunpack.c.l.bf16 %v545
      %v562 = vunpack.c.h.bf16 %v545
      %v563 = vunpack.c.l.bf16 %v546
      %v564 = vunpack.c.h.bf16 %v546
      %v565 = vunpack.c.l.bf16 %v547
      %v566 = vunpack.c.h.bf16 %v547
      %v567 = vunpack.c.l.bf16 %v548
      %v568 = vunpack.c.h.bf16 %v548
      %v569 = vunpack.c.l.bf16 %v549
      %v570 = vunpack.c.h.bf16 %v549
      %v571 = vunpack.c.l.bf16 %v550
      %v572 = vunpack.c.h.bf16 %v550
      %v573 = vunpack.c.l.bf16 %v551
      %v574 = vunpack.c.h.bf16 %v551
      %v575 = vunpack.c.l.bf16 %v552
      %v576 = vunpack.c.h.bf16 %v552
      %v577 = vunpack.c.l.bf16 %v553
      %v578 = vunpack.c.h.bf16 %v553
      %v579 = vunpack.c.l.bf16 %v554
      %v580 = vunpack.c.h.bf16 %v554
      %v581 = vunpack.c.l.bf16 %v555
      %v582 = vunpack.c.h.bf16 %v555
      %v583 = vunpack.c.l.bf16 %v556
      %v584 = vunpack.c.h.bf16 %v556
      %v585 = vmul.f32 %v515, %v557
      %v586 = vmul.f32 %v516, %v558
      %v587 = vmul.f32 %v517, %v559
      %v588 = vmul.f32 %v518, %v560
      %v589 = vmul.f32 %v519, %v561
      %v590 = vmul.f32 %v520, %v562
      %v591 = vmul.f32 %v521, %v563
      %v592 = vmul.f32 %v522, %v564
      %v593 = vmul.f32 %v523, %v565
      %v594 = vmul.f32 %v524, %v566
      %v595 = vmul.f32 %v525, %v567
      %v596 = vmul.f32 %v526, %v568
      %v597 = vmul.f32 %v527, %v569
      %v598 = vmul.f32 %v528, %v570
      %v599 = vmul.f32 %v529, %v571
      %v600 = vmul.f32 %v530, %v572
      %v601 = vmul.f32 %v531, %v573
      %v602 = vmul.f32 %v532, %v574
      %v603 = vmul.f32 %v533, %v575
      %v604 = vmul.f32 %v534, %v576
      %v605 = vmul.f32 %v535, %v577
      %v606 = vmul.f32 %v536, %v578
      %v607 = vmul.f32 %v537, %v579
      %v608 = vmul.f32 %v538, %v580
      %v609 = vmul.f32 %v539, %v581
      %v610 = vmul.f32 %v540, %v582
      %v611 = vmul.f32 %v541, %v583
      %v612 = vmul.f32 %v542, %v584
      %v613 = vld [vmem:[%s2] sm:$0xff]
      %v614 = vld [vmem:[%s2 + $0x8] sm:$0xff]
      %v615 = vld [vmem:[%s2 + $0x10] sm:$0xff]
      %v616 = vld [vmem:[%s2 + $0x18] sm:$0xff]
      %v617 = vld [vmem:[%s2 + $0x20] sm:$0xff]
      %v618 = vld [vmem:[%s2 + $0x28] sm:$0xff]
      %v619 = vld [vmem:[%s2 + $0x30] sm:$0xff]
      %v620 = vld [vmem:[%s2 + $0x38] sm:$0xff]
      %v621 = vld [vmem:[%s2 + $0x40] sm:$0xff]
      %v622 = vld [vmem:[%s2 + $0x48] sm:$0xff]
      %v623 = vld [vmem:[%s2 + $0x50] sm:$0xff]
      %v624 = vld [vmem:[%s2 + $0x58] sm:$0xff]
      %v625 = vld [vmem:[%s2 + $0x60] sm:$0xff]
      %v626 = vld [vmem:[%s2 + $0x68] sm:$0xff]
      %v627 = vld [vmem:[%s2 + $0x70] sm:$0xff]
      %v628 = vld [vmem:[%s2 + $0x78] sm:$0xff]
      %v629 = vld [vmem:[%s2 + $0x80] sm:$0xff]
      %v630 = vld [vmem:[%s2 + $0x88] sm:$0xff]
      %v631 = vld [vmem:[%s2 + $0x90] sm:$0xff]
      %v632 = vld [vmem:[%s2 + $0x98] sm:$0xff]
      %v633 = vld [vmem:[%s2 + $0xa0] sm:$0xff]
      %v634 = vld [vmem:[%s2 + $0xa8] sm:$0xff]
      %v635 = vld [vmem:[%s2 + $0xb0] sm:$0xff]
      %v636 = vld [vmem:[%s2 + $0xb8] sm:$0xff]
      %v637 = vld [vmem:[%s2 + $0xc0] sm:$0xff]
      %v638 = vld [vmem:[%s3] sm:$0xff]
      %v639 = vld [vmem:[%s3 + $0x8] sm:$0xff]
      %v640 = vld [vmem:[%s3 + $0x10] sm:$0xff]
      %v641 = vld [vmem:[%s3 + $0x18] sm:$0xff]
      %v642 = vld [vmem:[%s3 + $0x20] sm:$0xff]
      %v643 = vld [vmem:[%s3 + $0x28] sm:$0xff]
      %v644 = vld [vmem:[%s3 + $0x30] sm:$0xff]
      %v645 = vld [vmem:[%s3 + $0x38] sm:$0xff]
      %v646 = vld [vmem:[%s3 + $0x40] sm:$0xff]
      %v647 = vld [vmem:[%s3 + $0x48] sm:$0xff]
      %v648 = vld [vmem:[%s3 + $0x50] sm:$0xff]
      %v649 = vld [vmem:[%s3 + $0x58] sm:$0xff]
      %v650 = vld [vmem:[%s3 + $0x60] sm:$0xff]
      %v651 = vld [vmem:[%s3 + $0x68] sm:$0xff]
      %v652 = vld [vmem:[%s3 + $0x70] sm:$0xff]
      %v653 = vld [vmem:[%s3 + $0x78] sm:$0xff]
      %v654 = vld [vmem:[%s3 + $0x80] sm:$0xff]
      %v655 = vld [vmem:[%s3 + $0x88] sm:$0xff]
      %v656 = vld [vmem:[%s3 + $0x90] sm:$0xff]
      %v657 = vld [vmem:[%s3 + $0x98] sm:$0xff]
      %v658 = vld [vmem:[%s3 + $0xa0] sm:$0xff]
      %v659 = vld [vmem:[%s3 + $0xa8] sm:$0xff]
      %v660 = vld [vmem:[%s3 + $0xb0] sm:$0xff]
      %v661 = vld [vmem:[%s3 + $0xb8] sm:$0xff]
      %v662 = vld [vmem:[%s3 + $0xc0] sm:$0xff]
      %vm663 = vcmask 588800
      %v665 = vsel %vm663, %v558, 0
      %v668 = vsel %vm663, %v560, 0
      %v671 = vsel %vm663, %v562, 0
      %v674 = vsel %vm663, %v564, 0
      %v677 = vsel %vm663, %v566, 0
      %v680 = vsel %vm663, %v568, 0
      %v683 = vsel %vm663, %v570, 0
      %v686 = vsel %vm663, %v572, 0
      %v689 = vsel %vm663, %v574, 0
      %v692 = vsel %vm663, %v576, 0
      %v695 = vsel %vm663, %v578, 0
      %v698 = vsel %vm663, %v580, 0
      %v701 = vsel %vm663, %v582, 0
      %v704 = vsel %vm663, %v584, 0
      %706 = vmatprep.subr.mxu0 0.0
      %707 = vmatpush1.msra.mxu0 %v653
      %708 = vmatprep.subr.mxu0 0.0
      %709 = vmatpush1.msra.mxu0 %v652
      %710 = vmatprep.subr.mxu0 0.0
      %711 = vmatpush1.msra.mxu0 %v651
      %712 = vmatprep.subr.mxu0 0.0
      %713 = vmatpush1.msra.mxu0 %v650
      %714 = vmatprep.subr.mxu0 0.0
      %715 = vmatpush1.msra.mxu0 %v649
      %716 = vmatprep.subr.mxu0 0.0
      %717 = vmatpush1.msra.mxu0 %v648
      %718 = vmatprep.subr.mxu0 0.0
      %719 = vmatpush1.msra.mxu0 %v647
      %720 = vmatprep.subr.mxu0 0.0
      %721 = vmatpush1.msra.mxu0 %v646
      %722 = vmatprep.subr.mxu0 0.0
      %723 = vmatpush1.msra.mxu0 %v645
      %724 = vmatprep.subr.mxu0 0.0
      %725 = vmatpush1.msra.mxu0 %v644
      %726 = vmatprep.subr.mxu0 0.0
      %727 = vmatpush1.msra.mxu0 %v643
      %728 = vmatprep.subr.mxu0 0.0
      %729 = vmatpush1.msra.mxu0 %v642
      %730 = vmatprep.subr.mxu0 0.0
      %731 = vmatpush1.msra.mxu0 %v641
      %732 = vmatprep.subr.mxu0 0.0
      %733 = vmatpush1.msra.mxu0 %v640
      %734 = vmatprep.subr.mxu0 0.0
      %735 = vmatpush1.msra.mxu0 %v639
      %736 = vmatprep.subr.mxu0 0.0
      %737 = vmatpush1.msra.mxu0 %v638
      %738 = vmatprep.subr.mxu0 0.0
      %739 = vmatpush2.msra.mxu0 0.0
      %740 = vmatprep.subr.mxu0 0.0
      %741 = vmatpush2.msra.mxu0 0.0
      %742 = vmatprep.subr.mxu0 0.0
      %743 = vmatpush2.msra.mxu0 0.0
      %744 = vmatprep.subr.mxu0 0.0
      %745 = vmatpush2.msra.mxu0 0.0
      %746 = vmatprep.subr.mxu0 0.0
      %747 = vmatpush2.msra.mxu0 0.0
      %748 = vmatprep.subr.mxu0 0.0
      %749 = vmatpush2.msra.mxu0 0.0
      %750 = vmatprep.subr.mxu0 0.0
      %751 = vmatpush2.msra.mxu0 0.0
      %752 = vmatprep.subr.mxu0 0.0
      %753 = vmatpush2.msra.mxu0 %v662
      %754 = vmatprep.subr.mxu0 0.0
      %755 = vmatpush2.msra.mxu0 %v661
      %756 = vmatprep.subr.mxu0 0.0
      %757 = vmatpush2.msra.mxu0 %v660
      %758 = vmatprep.subr.mxu0 0.0
      %759 = vmatpush2.msra.mxu0 %v659
      %760 = vmatprep.subr.mxu0 0.0
      %761 = vmatpush2.msra.mxu0 %v658
      %762 = vmatprep.subr.mxu0 0.0
      %763 = vmatpush2.msra.mxu0 %v657
      %764 = vmatprep.subr.mxu0 0.0
      %765 = vmatpush2.msra.mxu0 %v656
      %766 = vmatprep.subr.mxu0 0.0
      %767 = vmatpush2.msra.mxu0 %v655
      %768 = vmatprep.subr.mxu0 0.0
      %769 = vmatpush2.msra.mxu0 %v654
      %770 = vmatprep.mubr.f32.mxu0 %v665
      %771 = vmatmul.mubr.f32.gmra.mxu0 %v557
      %v772 = vpop.f32.mrf.mxu0
      %v773 = vadd.f32 0.0, %v772
      %v774 = vpop.f32.mrf.mxu0
      %775 = vmatprep.mubr.f32.mxu0 %v668
      %776 = vmatmul.mubr.f32.gmra.mxu0 %v559
      %v777 = vpop.f32.mrf.mxu0
      %v778 = vadd.f32 0.0, %v777
      %v779 = vpop.f32.mrf.mxu0
      %780 = vmatprep.mubr.f32.mxu0 %v671
      %781 = vmatmul.mubr.f32.gmra.mxu0 %v561
      %v782 = vpop.f32.mrf.mxu0
      %v783 = vadd.f32 0.0, %v782
      %v784 = vpop.f32.mrf.mxu0
      %785 = vmatprep.mubr.f32.mxu0 %v674
      %786 = vmatmul.mubr.f32.gmra.mxu0 %v563
      %v787 = vpop.f32.mrf.mxu0
      %v788 = vadd.f32 0.0, %v787
      %v789 = vpop.f32.mrf.mxu0
      %790 = vmatprep.mubr.f32.mxu0 %v677
      %791 = vmatmul.mubr.f32.gmra.mxu0 %v565
      %v792 = vpop.f32.mrf.mxu0
      %v793 = vadd.f32 0.0, %v792
      %v794 = vpop.f32.mrf.mxu0
      %795 = vmatprep.mubr.f32.mxu0 %v680
      %796 = vmatmul.mubr.f32.gmra.mxu0 %v567
      %v797 = vpop.f32.mrf.mxu0
      %v798 = vadd.f32 0.0, %v797
      %v799 = vpop.f32.mrf.mxu0
      %800 = vmatprep.mubr.f32.mxu0 %v683
      %801 = vmatmul.mubr.f32.gmra.mxu0 %v569
      %v802 = vpop.f32.mrf.mxu0
      %v803 = vadd.f32 0.0, %v802
      %v804 = vpop.f32.mrf.mxu0
      %805 = vmatprep.mubr.f32.mxu0 %v686
      %806 = vmatmul.mubr.f32.gmra.mxu0 %v571
      %v807 = vpop.f32.mrf.mxu0
      %v808 = vadd.f32 0.0, %v807
      %v809 = vpop.f32.mrf.mxu0
      %810 = vmatprep.mubr.f32.mxu0 %v689
      %811 = vmatmul.mubr.f32.gmra.mxu0 %v573
      %v812 = vpop.f32.mrf.mxu0
      %v813 = vadd.f32 0.0, %v812
      %v814 = vpop.f32.mrf.mxu0
      %815 = vmatprep.mubr.f32.mxu0 %v692
      %816 = vmatmul.mubr.f32.gmra.mxu0 %v575
      %v817 = vpop.f32.mrf.mxu0
      %v818 = vadd.f32 0.0, %v817
      %v819 = vpop.f32.mrf.mxu0
      %820 = vmatprep.mubr.f32.mxu0 %v695
      %821 = vmatmul.mubr.f32.gmra.mxu0 %v577
      %v822 = vpop.f32.mrf.mxu0
      %v823 = vadd.f32 0.0, %v822
      %v824 = vpop.f32.mrf.mxu0
      %825 = vmatprep.mubr.f32.mxu0 %v698
      %826 = vmatmul.mubr.f32.gmra.mxu0 %v579
      %v827 = vpop.f32.mrf.mxu0
      %v828 = vadd.f32 0.0, %v827
      %v829 = vpop.f32.mrf.mxu0
      %830 = vmatprep.mubr.f32.mxu0 %v701
      %831 = vmatmul.mubr.f32.gmra.mxu0 %v581
      %v832 = vpop.f32.mrf.mxu0
      %v833 = vadd.f32 0.0, %v832
      %v834 = vpop.f32.mrf.mxu0
      %835 = vmatprep.mubr.f32.mxu0 %v704
      %836 = vmatmul.mubr.f32.gmra.mxu0 %v583
      %v837 = vpop.f32.mrf.mxu0
      %v838 = vadd.f32 0.0, %v837
      %v839 = vpop.f32.mrf.mxu0
      %840 = vdwg.mxu0
      %v842 = vsel %vm663, %v516, 0
      %v845 = vsel %vm663, %v518, 0
      %v848 = vsel %vm663, %v520, 0
      %v851 = vsel %vm663, %v522, 0
      %v854 = vsel %vm663, %v524, 0
      %v857 = vsel %vm663, %v526, 0
      %v860 = vsel %vm663, %v528, 0
      %v863 = vsel %vm663, %v530, 0
      %v866 = vsel %vm663, %v532, 0
      %v869 = vsel %vm663, %v534, 0
      %v872 = vsel %vm663, %v536, 0
      %v875 = vsel %vm663, %v538, 0
      %v878 = vsel %vm663, %v540, 0
      %v881 = vsel %vm663, %v542, 0
      %883 = vmatprep.subr.mxu0 0.0
      %884 = vmatpush1.msra.mxu0 %v628
      %885 = vmatprep.subr.mxu0 0.0
      %886 = vmatpush1.msra.mxu0 %v627
      %887 = vmatprep.subr.mxu0 0.0
      %888 = vmatpush1.msra.mxu0 %v626
      %889 = vmatprep.subr.mxu0 0.0
      %890 = vmatpush1.msra.mxu0 %v625
      %891 = vmatprep.subr.mxu0 0.0
      %892 = vmatpush1.msra.mxu0 %v624
      %893 = vmatprep.subr.mxu0 0.0
      %894 = vmatpush1.msra.mxu0 %v623
      %895 = vmatprep.subr.mxu0 0.0
      %896 = vmatpush1.msra.mxu0 %v622
      %897 = vmatprep.subr.mxu0 0.0
      %898 = vmatpush1.msra.mxu0 %v621
      %899 = vmatprep.subr.mxu0 0.0
      %900 = vmatpush1.msra.mxu0 %v620
      %901 = vmatprep.subr.mxu0 0.0
      %902 = vmatpush1.msra.mxu0 %v619
      %903 = vmatprep.subr.mxu0 0.0
      %904 = vmatpush1.msra.mxu0 %v618
      %905 = vmatprep.subr.mxu0 0.0
      %906 = vmatpush1.msra.mxu0 %v617
      %907 = vmatprep.subr.mxu0 0.0
      %908 = vmatpush1.msra.mxu0 %v616
      %909 = vmatprep.subr.mxu0 0.0
      %910 = vmatpush1.msra.mxu0 %v615
      %911 = vmatprep.subr.mxu0 0.0
      %912 = vmatpush1.msra.mxu0 %v614
      %913 = vmatprep.subr.mxu0 0.0
      %914 = vmatpush1.msra.mxu0 %v613
      %915 = vmatprep.subr.mxu0 0.0
      %916 = vmatpush2.msra.mxu0 0.0
      %917 = vmatprep.subr.mxu0 0.0
      %918 = vmatpush2.msra.mxu0 0.0
      %919 = vmatprep.subr.mxu0 0.0
      %920 = vmatpush2.msra.mxu0 0.0
      %921 = vmatprep.subr.mxu0 0.0
      %922 = vmatpush2.msra.mxu0 0.0
      %923 = vmatprep.subr.mxu0 0.0
      %924 = vmatpush2.msra.mxu0 0.0
      %925 = vmatprep.subr.mxu0 0.0
      %926 = vmatpush2.msra.mxu0 0.0
      %927 = vmatprep.subr.mxu0 0.0
      %928 = vmatpush2.msra.mxu0 0.0
      %929 = vmatprep.subr.mxu0 0.0
      %930 = vmatpush2.msra.mxu0 %v637
      %931 = vmatprep.subr.mxu0 0.0
      %932 = vmatpush2.msra.mxu0 %v636
      %933 = vmatprep.subr.mxu0 0.0
      %934 = vmatpush2.msra.mxu0 %v635
      %935 = vmatprep.subr.mxu0 0.0
      %936 = vmatpush2.msra.mxu0 %v634
      %937 = vmatprep.subr.mxu0 0.0
      %938 = vmatpush2.msra.mxu0 %v633
      %939 = vmatprep.subr.mxu0 0.0
      %940 = vmatpush2.msra.mxu0 %v632
      %941 = vmatprep.subr.mxu0 0.0
      %942 = vmatpush2.msra.mxu0 %v631
      %943 = vmatprep.subr.mxu0 0.0
      %944 = vmatpush2.msra.mxu0 %v630
      %945 = vmatprep.subr.mxu0 0.0
      %946 = vmatpush2.msra.mxu0 %v629
      %947 = vmatprep.mubr.f32.mxu0 %v842
      %948 = vmatmul.mubr.f32.gmra.mxu0 %v515
      %v949 = vpop.f32.mrf.mxu0
      %v950 = vadd.f32 %v773, %v949
      %v951 = vpop.f32.mrf.mxu0
      %952 = vmatprep.mubr.f32.mxu0 %v845
      %953 = vmatmul.mubr.f32.gmra.mxu0 %v517
      %v954 = vpop.f32.mrf.mxu0
      %v955 = vadd.f32 %v778, %v954
      %v956 = vpop.f32.mrf.mxu0
      %957 = vmatprep.mubr.f32.mxu0 %v848
      %958 = vmatmul.mubr.f32.gmra.mxu0 %v519
      %v959 = vpop.f32.mrf.mxu0
      %v960 = vadd.f32 %v783, %v959
      %v961 = vpop.f32.mrf.mxu0
      %962 = vmatprep.mubr.f32.mxu0 %v851
      %963 = vmatmul.mubr.f32.gmra.mxu0 %v521
      %v964 = vpop.f32.mrf.mxu0
      %v965 = vadd.f32 %v788, %v964
      %v966 = vpop.f32.mrf.mxu0
      %967 = vmatprep.mubr.f32.mxu0 %v854
      %968 = vmatmul.mubr.f32.gmra.mxu0 %v523
      %v969 = vpop.f32.mrf.mxu0
      %v970 = vadd.f32 %v793, %v969
      %v971 = vpop.f32.mrf.mxu0
      %972 = vmatprep.mubr.f32.mxu0 %v857
      %973 = vmatmul.mubr.f32.gmra.mxu0 %v525
      %v974 = vpop.f32.mrf.mxu0
      %v975 = vadd.f32 %v798, %v974
      %v976 = vpop.f32.mrf.mxu0
      %977 = vmatprep.mubr.f32.mxu0 %v860
      %978 = vmatmul.mubr.f32.gmra.mxu0 %v527
      %v979 = vpop.f32.mrf.mxu0
      %v980 = vadd.f32 %v803, %v979
      %v981 = vpop.f32.mrf.mxu0
      %982 = vmatprep.mubr.f32.mxu0 %v863
      %983 = vmatmul.mubr.f32.gmra.mxu0 %v529
      %v984 = vpop.f32.mrf.mxu0
      %v985 = vadd.f32 %v808, %v984
      %v986 = vpop.f32.mrf.mxu0
      %987 = vmatprep.mubr.f32.mxu0 %v866
      %988 = vmatmul.mubr.f32.gmra.mxu0 %v531
      %v989 = vpop.f32.mrf.mxu0
      %v990 = vadd.f32 %v813, %v989
      %v991 = vpop.f32.mrf.mxu0
      %992 = vmatprep.mubr.f32.mxu0 %v869
      %993 = vmatmul.mubr.f32.gmra.mxu0 %v533
      %v994 = vpop.f32.mrf.mxu0
      %v995 = vadd.f32 %v818, %v994
      %v996 = vpop.f32.mrf.mxu0
      %997 = vmatprep.mubr.f32.mxu0 %v872
      %998 = vmatmul.mubr.f32.gmra.mxu0 %v535
      %v999 = vpop.f32.mrf.mxu0
      %v1000 = vadd.f32 %v823, %v999
      %v1001 = vpop.f32.mrf.mxu0
      %1002 = vmatprep.mubr.f32.mxu0 %v875
      %1003 = vmatmul.mubr.f32.gmra.mxu0 %v537
      %v1004 = vpop.f32.mrf.mxu0
      %v1005 = vadd.f32 %v828, %v1004
      %v1006 = vpop.f32.mrf.mxu0
      %1007 = vmatprep.mubr.f32.mxu0 %v878
      %1008 = vmatmul.mubr.f32.gmra.mxu0 %v539
      %v1009 = vpop.f32.mrf.mxu0
      %v1010 = vadd.f32 %v833, %v1009
      %v1011 = vpop.f32.mrf.mxu0
      %1012 = vmatprep.mubr.f32.mxu0 %v881
      %1013 = vmatmul.mubr.f32.gmra.mxu0 %v541
      %v1014 = vpop.f32.mrf.mxu0
      %v1015 = vadd.f32 %v838, %v1014
      %v1016 = vpop.f32.mrf.mxu0
      %1017 = vdwg.mxu0
      %v1018 = vld [vmem:[%s4] sm:$0x1]
      %v1020 = vlaneseq
      %v1021 = vshrl.u32 %v1020, 7
      %v1022 = vsub.s32 0, %v1021
      %v1023 = vrot.slane %v1018, %v1022
      %v1025 = vadd.f32 %v950, %v1023
      %v1026 = vadd.f32 %v955, %v1023
      %v1027 = vadd.f32 %v960, %v1023
      %v1028 = vadd.f32 %v965, %v1023
      %v1029 = vadd.f32 %v970, %v1023
      %v1030 = vadd.f32 %v975, %v1023
      %v1031 = vadd.f32 %v980, %v1023
      %v1032 = vadd.f32 %v985, %v1023
      %v1033 = vadd.f32 %v990, %v1023
      %v1034 = vadd.f32 %v995, %v1023
      %v1035 = vadd.f32 %v1000, %v1023
      %v1036 = vadd.f32 %v1005, %v1023
      %v1037 = vadd.f32 %v1010, %v1023
      %v1038 = vadd.f32 %v1015, %v1023
      %v1039 = vmax.f32 %v1025, 0.0
      %v1040 = vmax.f32 %v1026, 0.0
      %v1041 = vmax.f32 %v1027, 0.0
      %v1042 = vmax.f32 %v1028, 0.0
      %v1043 = vmax.f32 %v1029, 0.0
      %v1044 = vmax.f32 %v1030, 0.0
      %v1045 = vmax.f32 %v1031, 0.0
      %v1046 = vmax.f32 %v1032, 0.0
      %v1047 = vmax.f32 %v1033, 0.0
      %v1048 = vmax.f32 %v1034, 0.0
      %v1049 = vmax.f32 %v1035, 0.0
      %v1050 = vmax.f32 %v1036, 0.0
      %v1051 = vmax.f32 %v1037, 0.0
      %v1052 = vmax.f32 %v1038, 0.0
      %v1053 = vld [vmem:[%s5] sm:$0xff]
      %v1054 = vld [vmem:[%s5 + $0x8] sm:$0xff]
      %v1055 = vld [vmem:[%s5 + $0x10] sm:$0xff]
      %v1056 = vld [vmem:[%s5 + $0x18] sm:$0xff]
      %v1057 = vld [vmem:[%s5 + $0x20] sm:$0xff]
      %v1058 = vld [vmem:[%s5 + $0x28] sm:$0xff]
      %v1059 = vld [vmem:[%s5 + $0x30] sm:$0xff]
      %v1060 = vld [vmem:[%s5 + $0x38] sm:$0xff]
      %v1061 = vld [vmem:[%s6] sm:$0x1]
      %v1063 = vlaneseq
      %v1064 = vshrl.u32 %v1063, 7
      %v1065 = vsub.s32 0, %v1064
      %v1066 = vrot.slane %v1061, %v1065
      %vm1068 = vcmask 523264
      %v1070 = vsel %vm1068, %v1039, 0
      %v1073 = vsel %vm1068, %v1040, 0
      %v1076 = vsel %vm1068, %v1041, 0
      %v1079 = vsel %vm1068, %v1042, 0
      %v1082 = vsel %vm1068, %v1043, 0
      %v1085 = vsel %vm1068, %v1044, 0
      %v1088 = vsel %vm1068, %v1045, 0
      %v1091 = vsel %vm1068, %v1046, 0
      %v1094 = vsel %vm1068, %v1047, 0
      %v1097 = vsel %vm1068, %v1048, 0
      %v1100 = vsel %vm1068, %v1049, 0
      %v1103 = vsel %vm1068, %v1050, 0
      %v1106 = vsel %vm1068, %v1051, 0
      %v1109 = vsel %vm1068, %v1052, 0
      %1111 = vmatprep.subr.mxu0 0.0
      %1112 = vmatpush1.msra.mxu0 0.0
      %1113 = vmatprep.subr.mxu0 0.0
      %1114 = vmatpush1.msra.mxu0 0.0
      %1115 = vmatprep.subr.mxu0 0.0
      %1116 = vmatpush1.msra.mxu0 0.0
      %1117 = vmatprep.subr.mxu0 0.0
      %1118 = vmatpush1.msra.mxu0 0.0
      %1119 = vmatprep.subr.mxu0 0.0
      %1120 = vmatpush1.msra.mxu0 0.0
      %1121 = vmatprep.subr.mxu0 0.0
      %1122 = vmatpush1.msra.mxu0 0.0
      %1123 = vmatprep.subr.mxu0 0.0
      %1124 = vmatpush1.msra.mxu0 0.0
      %1125 = vmatprep.subr.mxu0 0.0
      %1126 = vmatpush1.msra.mxu0 0.0
      %1127 = vmatprep.subr.mxu0 0.0
      %1128 = vmatpush1.msra.mxu0 %v1060
      %1129 = vmatprep.subr.mxu0 0.0
      %1130 = vmatpush1.msra.mxu0 %v1059
      %1131 = vmatprep.subr.mxu0 0.0
      %1132 = vmatpush1.msra.mxu0 %v1058
      %1133 = vmatprep.subr.mxu0 0.0
      %1134 = vmatpush1.msra.mxu0 %v1057
      %1135 = vmatprep.subr.mxu0 0.0
      %1136 = vmatpush1.msra.mxu0 %v1056
      %1137 = vmatprep.subr.mxu0 0.0
      %1138 = vmatpush1.msra.mxu0 %v1055
      %1139 = vmatprep.subr.mxu0 0.0
      %1140 = vmatpush1.msra.mxu0 %v1054
      %1141 = vmatprep.subr.mxu0 0.0
      %1142 = vmatpush1.msra.mxu0 %v1053
      %1143 = vmatprep.subr.mxu0 0.0
      %1144 = vmatpush2.msra.mxu0 0.0
      %1145 = vmatprep.subr.mxu0 0.0
      %1146 = vmatpush2.msra.mxu0 0.0
      %1147 = vmatprep.subr.mxu0 0.0
      %1148 = vmatpush2.msra.mxu0 0.0
      %1149 = vmatprep.subr.mxu0 0.0
      %1150 = vmatpush2.msra.mxu0 0.0
      %1151 = vmatprep.subr.mxu0 0.0
      %1152 = vmatpush2.msra.mxu0 0.0
      %1153 = vmatprep.subr.mxu0 0.0
      %1154 = vmatpush2.msra.mxu0 0.0
      %1155 = vmatprep.subr.mxu0 0.0
      %1156 = vmatpush2.msra.mxu0 0.0
      %1157 = vmatprep.subr.mxu0 0.0
      %1158 = vmatpush2.msra.mxu0 0.0
      %1159 = vmatprep.subr.mxu0 0.0
      %1160 = vmatpush2.msra.mxu0 0.0
      %1161 = vmatprep.subr.mxu0 0.0
      %1162 = vmatpush2.msra.mxu0 0.0
      %1163 = vmatprep.subr.mxu0 0.0
      %1164 = vmatpush2.msra.mxu0 0.0
      %1165 = vmatprep.subr.mxu0 0.0
      %1166 = vmatpush2.msra.mxu0 0.0
      %1167 = vmatprep.subr.mxu0 0.0
      %1168 = vmatpush2.msra.mxu0 0.0
      %1169 = vmatprep.subr.mxu0 0.0
      %1170 = vmatpush2.msra.mxu0 0.0
      %1171 = vmatprep.subr.mxu0 0.0
      %1172 = vmatpush2.msra.mxu0 0.0
      %1173 = vmatprep.subr.mxu0 0.0
      %1174 = vmatpush2.msra.mxu0 0.0
      %1175 = vmatprep.mubr.f32.mxu0 0.0
      %1176 = vmatmul.mubr.f32.gmra.mxu0 %v1070
      %v1177 = vpop.f32.mrf.mxu0
      %v1178 = vadd.f32 %v1066, %v1177
      %v1179 = vpop.f32.mrf.mxu0
      %1180 = vmatprep.mubr.f32.mxu0 0.0
      %1181 = vmatmul.mubr.f32.gmra.mxu0 %v1073
      %v1182 = vpop.f32.mrf.mxu0
      %v1183 = vadd.f32 %v1066, %v1182
      %v1184 = vpop.f32.mrf.mxu0
      %1185 = vmatprep.mubr.f32.mxu0 0.0
      %1186 = vmatmul.mubr.f32.gmra.mxu0 %v1076
      %v1187 = vpop.f32.mrf.mxu0
      %v1188 = vadd.f32 %v1066, %v1187
      %v1189 = vpop.f32.mrf.mxu0
      %1190 = vmatprep.mubr.f32.mxu0 0.0
      %1191 = vmatmul.mubr.f32.gmra.mxu0 %v1079
      %v1192 = vpop.f32.mrf.mxu0
      %v1193 = vadd.f32 %v1066, %v1192
      %v1194 = vpop.f32.mrf.mxu0
      %1195 = vmatprep.mubr.f32.mxu0 0.0
      %1196 = vmatmul.mubr.f32.gmra.mxu0 %v1082
      %v1197 = vpop.f32.mrf.mxu0
      %v1198 = vadd.f32 %v1066, %v1197
      %v1199 = vpop.f32.mrf.mxu0
      %1200 = vmatprep.mubr.f32.mxu0 0.0
      %1201 = vmatmul.mubr.f32.gmra.mxu0 %v1085
      %v1202 = vpop.f32.mrf.mxu0
      %v1203 = vadd.f32 %v1066, %v1202
      %v1204 = vpop.f32.mrf.mxu0
      %1205 = vmatprep.mubr.f32.mxu0 0.0
      %1206 = vmatmul.mubr.f32.gmra.mxu0 %v1088
      %v1207 = vpop.f32.mrf.mxu0
      %v1208 = vadd.f32 %v1066, %v1207
      %v1209 = vpop.f32.mrf.mxu0
      %1210 = vmatprep.mubr.f32.mxu0 0.0
      %1211 = vmatmul.mubr.f32.gmra.mxu0 %v1091
      %v1212 = vpop.f32.mrf.mxu0
      %v1213 = vadd.f32 %v1066, %v1212
      %v1214 = vpop.f32.mrf.mxu0
      %1215 = vmatprep.mubr.f32.mxu0 0.0
      %1216 = vmatmul.mubr.f32.gmra.mxu0 %v1094
      %v1217 = vpop.f32.mrf.mxu0
      %v1218 = vadd.f32 %v1066, %v1217
      %v1219 = vpop.f32.mrf.mxu0
      %1220 = vmatprep.mubr.f32.mxu0 0.0
      %1221 = vmatmul.mubr.f32.gmra.mxu0 %v1097
      %v1222 = vpop.f32.mrf.mxu0
      %v1223 = vadd.f32 %v1066, %v1222
      %v1224 = vpop.f32.mrf.mxu0
      %1225 = vmatprep.mubr.f32.mxu0 0.0
      %1226 = vmatmul.mubr.f32.gmra.mxu0 %v1100
      %v1227 = vpop.f32.mrf.mxu0
      %v1228 = vadd.f32 %v1066, %v1227
      %v1229 = vpop.f32.mrf.mxu0
      %1230 = vmatprep.mubr.f32.mxu0 0.0
      %1231 = vmatmul.mubr.f32.gmra.mxu0 %v1103
      %v1232 = vpop.f32.mrf.mxu0
      %v1233 = vadd.f32 %v1066, %v1232
      %v1234 = vpop.f32.mrf.mxu0
      %1235 = vmatprep.mubr.f32.mxu0 0.0
      %1236 = vmatmul.mubr.f32.gmra.mxu0 %v1106
      %v1237 = vpop.f32.mrf.mxu0
      %v1238 = vadd.f32 %v1066, %v1237
      %v1239 = vpop.f32.mrf.mxu0
      %1240 = vmatprep.mubr.f32.mxu0 0.0
      %1241 = vmatmul.mubr.f32.gmra.mxu0 %v1109
      %v1242 = vpop.f32.mrf.mxu0
      %v1243 = vadd.f32 %v1066, %v1242
      %v1244 = vpop.f32.mrf.mxu0
      %1245 = vdwg.mxu0
      %v1246 = vmax.f32 %v1178, 0.0
      %v1247 = vmax.f32 %v1183, 0.0
      %v1248 = vmax.f32 %v1188, 0.0
      %v1249 = vmax.f32 %v1193, 0.0
      %v1250 = vmax.f32 %v1198, 0.0
      %v1251 = vmax.f32 %v1203, 0.0
      %v1252 = vmax.f32 %v1208, 0.0
      %v1253 = vmax.f32 %v1213, 0.0
      %v1254 = vmax.f32 %v1218, 0.0
      %v1255 = vmax.f32 %v1223, 0.0
      %v1256 = vmax.f32 %v1228, 0.0
      %v1257 = vmax.f32 %v1233, 0.0
      %v1258 = vmax.f32 %v1238, 0.0
      %v1259 = vmax.f32 %v1243, 0.0
      %v1260 = vld [vmem:[%s7] sm:$0xff]
      %v1261 = vld [vmem:[%s7 + $0x8] sm:$0xff]
      %v1262 = vld [vmem:[%s7 + $0x10] sm:$0xff]
      %v1263 = vld [vmem:[%s7 + $0x18] sm:$0xff]
      %v1264 = vld [vmem:[%s8] sm:$0x1]
      %v1266 = vlaneseq
      %v1267 = vshrl.u32 %v1266, 7
      %v1268 = vsub.s32 0, %v1267
      %v1269 = vrot.slane %v1264, %v1268
      %vm1271 = vcmask 261120
      %v1273 = vsel %vm1271, %v1246, 0
      %v1276 = vsel %vm1271, %v1247, 0
      %v1279 = vsel %vm1271, %v1248, 0
      %v1282 = vsel %vm1271, %v1249, 0
      %v1285 = vsel %vm1271, %v1250, 0
      %v1288 = vsel %vm1271, %v1251, 0
      %v1291 = vsel %vm1271, %v1252, 0
      %v1294 = vsel %vm1271, %v1253, 0
      %v1297 = vsel %vm1271, %v1254, 0
      %v1300 = vsel %vm1271, %v1255, 0
      %v1303 = vsel %vm1271, %v1256, 0
      %v1306 = vsel %vm1271, %v1257, 0
      %v1309 = vsel %vm1271, %v1258, 0
      %v1312 = vsel %vm1271, %v1259, 0
      %1314 = vmatprep.subr.mxu0 0.0
      %1315 = vmatpush1.msra.mxu0 0.0
      %1316 = vmatprep.subr.mxu0 0.0
      %1317 = vmatpush1.msra.mxu0 0.0
      %1318 = vmatprep.subr.mxu0 0.0
      %1319 = vmatpush1.msra.mxu0 0.0
      %1320 = vmatprep.subr.mxu0 0.0
      %1321 = vmatpush1.msra.mxu0 0.0
      %1322 = vmatprep.subr.mxu0 0.0
      %1323 = vmatpush1.msra.mxu0 0.0
      %1324 = vmatprep.subr.mxu0 0.0
      %1325 = vmatpush1.msra.mxu0 0.0
      %1326 = vmatprep.subr.mxu0 0.0
      %1327 = vmatpush1.msra.mxu0 0.0
      %1328 = vmatprep.subr.mxu0 0.0
      %1329 = vmatpush1.msra.mxu0 0.0
      %1330 = vmatprep.subr.mxu0 0.0
      %1331 = vmatpush1.msra.mxu0 0.0
      %1332 = vmatprep.subr.mxu0 0.0
      %1333 = vmatpush1.msra.mxu0 0.0
      %1334 = vmatprep.subr.mxu0 0.0
      %1335 = vmatpush1.msra.mxu0 0.0
      %1336 = vmatprep.subr.mxu0 0.0
      %1337 = vmatpush1.msra.mxu0 0.0
      %1338 = vmatprep.subr.mxu0 0.0
      %1339 = vmatpush1.msra.mxu0 %v1263
      %1340 = vmatprep.subr.mxu0 0.0
      %1341 = vmatpush1.msra.mxu0 %v1262
      %1342 = vmatprep.subr.mxu0 0.0
      %1343 = vmatpush1.msra.mxu0 %v1261
      %1344 = vmatprep.subr.mxu0 0.0
      %1345 = vmatpush1.msra.mxu0 %v1260
      %1346 = vmatprep.subr.mxu0 0.0
      %1347 = vmatpush2.msra.mxu0 0.0
      %1348 = vmatprep.subr.mxu0 0.0
      %1349 = vmatpush2.msra.mxu0 0.0
      %1350 = vmatprep.subr.mxu0 0.0
      %1351 = vmatpush2.msra.mxu0 0.0
      %1352 = vmatprep.subr.mxu0 0.0
      %1353 = vmatpush2.msra.mxu0 0.0
      %1354 = vmatprep.subr.mxu0 0.0
      %1355 = vmatpush2.msra.mxu0 0.0
      %1356 = vmatprep.subr.mxu0 0.0
      %1357 = vmatpush2.msra.mxu0 0.0
      %1358 = vmatprep.subr.mxu0 0.0
      %1359 = vmatpush2.msra.mxu0 0.0
      %1360 = vmatprep.subr.mxu0 0.0
      %1361 = vmatpush2.msra.mxu0 0.0
      %1362 = vmatprep.subr.mxu0 0.0
      %1363 = vmatpush2.msra.mxu0 0.0
      %1364 = vmatprep.subr.mxu0 0.0
      %1365 = vmatpush2.msra.mxu0 0.0
      %1366 = vmatprep.subr.mxu0 0.0
      %1367 = vmatpush2.msra.mxu0 0.0
      %1368 = vmatprep.subr.mxu0 0.0
      %1369 = vmatpush2.msra.mxu0 0.0
      %1370 = vmatprep.subr.mxu0 0.0
      %1371 = vmatpush2.msra.mxu0 0.0
      %1372 = vmatprep.subr.mxu0 0.0
      %1373 = vmatpush2.msra.mxu0 0.0
      %1374 = vmatprep.subr.mxu0 0.0
      %1375 = vmatpush2.msra.mxu0 0.0
      %1376 = vmatprep.subr.mxu0 0.0
      %1377 = vmatpush2.msra.mxu0 0.0
      %1378 = vmatprep.mubr.f32.mxu0 0.0
      %1379 = vmatmul.mubr.f32.gmra.mxu0 %v1273
      %v1380 = vpop.f32.mrf.mxu0
      %v1381 = vadd.f32 %v1269, %v1380
      %v1382 = vpop.f32.mrf.mxu0
      %1383 = vmatprep.mubr.f32.mxu0 0.0
      %1384 = vmatmul.mubr.f32.gmra.mxu0 %v1276
      %v1385 = vpop.f32.mrf.mxu0
      %v1386 = vadd.f32 %v1269, %v1385
      %v1387 = vpop.f32.mrf.mxu0
      %1388 = vmatprep.mubr.f32.mxu0 0.0
      %1389 = vmatmul.mubr.f32.gmra.mxu0 %v1279
      %v1390 = vpop.f32.mrf.mxu0
      %v1391 = vadd.f32 %v1269, %v1390
      %v1392 = vpop.f32.mrf.mxu0
      %1393 = vmatprep.mubr.f32.mxu0 0.0
      %1394 = vmatmul.mubr.f32.gmra.mxu0 %v1282
      %v1395 = vpop.f32.mrf.mxu0
      %v1396 = vadd.f32 %v1269, %v1395
      %v1397 = vpop.f32.mrf.mxu0
      %1398 = vmatprep.mubr.f32.mxu0 0.0
      %1399 = vmatmul.mubr.f32.gmra.mxu0 %v1285
      %v1400 = vpop.f32.mrf.mxu0
      %v1401 = vadd.f32 %v1269, %v1400
      %v1402 = vpop.f32.mrf.mxu0
      %1403 = vmatprep.mubr.f32.mxu0 0.0
      %1404 = vmatmul.mubr.f32.gmra.mxu0 %v1288
      %v1405 = vpop.f32.mrf.mxu0
      %v1406 = vadd.f32 %v1269, %v1405
      %v1407 = vpop.f32.mrf.mxu0
      %1408 = vmatprep.mubr.f32.mxu0 0.0
      %1409 = vmatmul.mubr.f32.gmra.mxu0 %v1291
      %v1410 = vpop.f32.mrf.mxu0
      %v1411 = vadd.f32 %v1269, %v1410
      %v1412 = vpop.f32.mrf.mxu0
      %1413 = vmatprep.mubr.f32.mxu0 0.0
      %1414 = vmatmul.mubr.f32.gmra.mxu0 %v1294
      %v1415 = vpop.f32.mrf.mxu0
      %v1416 = vadd.f32 %v1269, %v1415
      %v1417 = vpop.f32.mrf.mxu0
      %1418 = vmatprep.mubr.f32.mxu0 0.0
      %1419 = vmatmul.mubr.f32.gmra.mxu0 %v1297
      %v1420 = vpop.f32.mrf.mxu0
      %v1421 = vadd.f32 %v1269, %v1420
      %v1422 = vpop.f32.mrf.mxu0
      %1423 = vmatprep.mubr.f32.mxu0 0.0
      %1424 = vmatmul.mubr.f32.gmra.mxu0 %v1300
      %v1425 = vpop.f32.mrf.mxu0
      %v1426 = vadd.f32 %v1269, %v1425
      %v1427 = vpop.f32.mrf.mxu0
      %1428 = vmatprep.mubr.f32.mxu0 0.0
      %1429 = vmatmul.mubr.f32.gmra.mxu0 %v1303
      %v1430 = vpop.f32.mrf.mxu0
      %v1431 = vadd.f32 %v1269, %v1430
      %v1432 = vpop.f32.mrf.mxu0
      %1433 = vmatprep.mubr.f32.mxu0 0.0
      %1434 = vmatmul.mubr.f32.gmra.mxu0 %v1306
      %v1435 = vpop.f32.mrf.mxu0
      %v1436 = vadd.f32 %v1269, %v1435
      %v1437 = vpop.f32.mrf.mxu0
      %1438 = vmatprep.mubr.f32.mxu0 0.0
      %1439 = vmatmul.mubr.f32.gmra.mxu0 %v1309
      %v1440 = vpop.f32.mrf.mxu0
      %v1441 = vadd.f32 %v1269, %v1440
      %v1442 = vpop.f32.mrf.mxu0
      %1443 = vmatprep.mubr.f32.mxu0 0.0
      %1444 = vmatmul.mubr.f32.gmra.mxu0 %v1312
      %v1445 = vpop.f32.mrf.mxu0
      %v1446 = vadd.f32 %v1269, %v1445
      %v1447 = vpop.f32.mrf.mxu0
      %1448 = vdwg.mxu0
      %v1449 = vmax.f32 %v1381, 0.0
      %v1450 = vmax.f32 %v1386, 0.0
      %v1451 = vmax.f32 %v1391, 0.0
      %v1452 = vmax.f32 %v1396, 0.0
      %v1453 = vmax.f32 %v1401, 0.0
      %v1454 = vmax.f32 %v1406, 0.0
      %v1455 = vmax.f32 %v1411, 0.0
      %v1456 = vmax.f32 %v1416, 0.0
      %v1457 = vmax.f32 %v1421, 0.0
      %v1458 = vmax.f32 %v1426, 0.0
      %v1459 = vmax.f32 %v1431, 0.0
      %v1460 = vmax.f32 %v1436, 0.0
      %v1461 = vmax.f32 %v1441, 0.0
      %v1462 = vmax.f32 %v1446, 0.0
      %v1463 = vld [vmem:[%s9] sm:$0xff]
      %v1464 = vld [vmem:[%s9 + $0x8] sm:$0xff]
      %v1465 = vld [vmem:[%s10] sm:$0x1]
      %v1467 = vlaneseq
      %v1468 = vshrl.u32 %v1467, 7
      %v1469 = vsub.s32 0, %v1468
      %v1470 = vrot.slane %v1465, %v1469
      %vm1472 = vcmask 130048
      %v1474 = vsel %vm1472, %v1449, 0
      %v1477 = vsel %vm1472, %v1450, 0
      %v1480 = vsel %vm1472, %v1451, 0
      %v1483 = vsel %vm1472, %v1452, 0
      %v1486 = vsel %vm1472, %v1453, 0
      %v1489 = vsel %vm1472, %v1454, 0
      %v1492 = vsel %vm1472, %v1455, 0
      %v1495 = vsel %vm1472, %v1456, 0
      %v1498 = vsel %vm1472, %v1457, 0
      %v1501 = vsel %vm1472, %v1458, 0
      %v1504 = vsel %vm1472, %v1459, 0
      %v1507 = vsel %vm1472, %v1460, 0
      %v1510 = vsel %vm1472, %v1461, 0
      %v1513 = vsel %vm1472, %v1462, 0
      %1515 = vmatprep.subr.mxu0 0.0
      %1516 = vmatpush1.msra.mxu0 0.0
      %1517 = vmatprep.subr.mxu0 0.0
      %1518 = vmatpush1.msra.mxu0 0.0
      %1519 = vmatprep.subr.mxu0 0.0
      %1520 = vmatpush1.msra.mxu0 0.0
      %1521 = vmatprep.subr.mxu0 0.0
      %1522 = vmatpush1.msra.mxu0 0.0
      %1523 = vmatprep.subr.mxu0 0.0
      %1524 = vmatpush1.msra.mxu0 0.0
      %1525 = vmatprep.subr.mxu0 0.0
      %1526 = vmatpush1.msra.mxu0 0.0
      %1527 = vmatprep.subr.mxu0 0.0
      %1528 = vmatpush1.msra.mxu0 0.0
      %1529 = vmatprep.subr.mxu0 0.0
      %1530 = vmatpush1.msra.mxu0 0.0
      %1531 = vmatprep.subr.mxu0 0.0
      %1532 = vmatpush1.msra.mxu0 0.0
      %1533 = vmatprep.subr.mxu0 0.0
      %1534 = vmatpush1.msra.mxu0 0.0
      %1535 = vmatprep.subr.mxu0 0.0
      %1536 = vmatpush1.msra.mxu0 0.0
      %1537 = vmatprep.subr.mxu0 0.0
      %1538 = vmatpush1.msra.mxu0 0.0
      %1539 = vmatprep.subr.mxu0 0.0
      %1540 = vmatpush1.msra.mxu0 0.0
      %1541 = vmatprep.subr.mxu0 0.0
      %1542 = vmatpush1.msra.mxu0 0.0
      %1543 = vmatprep.subr.mxu0 0.0
      %1544 = vmatpush1.msra.mxu0 %v1464
      %1545 = vmatprep.subr.mxu0 0.0
      %1546 = vmatpush1.msra.mxu0 %v1463
      %1547 = vmatprep.subr.mxu0 0.0
      %1548 = vmatpush2.msra.mxu0 0.0
      %1549 = vmatprep.subr.mxu0 0.0
      %1550 = vmatpush2.msra.mxu0 0.0
      %1551 = vmatprep.subr.mxu0 0.0
      %1552 = vmatpush2.msra.mxu0 0.0
      %1553 = vmatprep.subr.mxu0 0.0
      %1554 = vmatpush2.msra.mxu0 0.0
      %1555 = vmatprep.subr.mxu0 0.0
      %1556 = vmatpush2.msra.mxu0 0.0
      %1557 = vmatprep.subr.mxu0 0.0
      %1558 = vmatpush2.msra.mxu0 0.0
      %1559 = vmatprep.subr.mxu0 0.0
      %1560 = vmatpush2.msra.mxu0 0.0
      %1561 = vmatprep.subr.mxu0 0.0
      %1562 = vmatpush2.msra.mxu0 0.0
      %1563 = vmatprep.subr.mxu0 0.0
      %1564 = vmatpush2.msra.mxu0 0.0
      %1565 = vmatprep.subr.mxu0 0.0
      %1566 = vmatpush2.msra.mxu0 0.0
      %1567 = vmatprep.subr.mxu0 0.0
      %1568 = vmatpush2.msra.mxu0 0.0
      %1569 = vmatprep.subr.mxu0 0.0
      %1570 = vmatpush2.msra.mxu0 0.0
      %1571 = vmatprep.subr.mxu0 0.0
      %1572 = vmatpush2.msra.mxu0 0.0
      %1573 = vmatprep.subr.mxu0 0.0
      %1574 = vmatpush2.msra.mxu0 0.0
      %1575 = vmatprep.subr.mxu0 0.0
      %1576 = vmatpush2.msra.mxu0 0.0
      %1577 = vmatprep.subr.mxu0 0.0
      %1578 = vmatpush2.msra.mxu0 0.0
      %1579 = vmatprep.mubr.f32.mxu0 0.0
      %1580 = vmatmul.mubr.f32.gmra.mxu0 %v1474
      %v1581 = vpop.f32.mrf.mxu0
      %v1582 = vadd.f32 %v1470, %v1581
      %v1583 = vpop.f32.mrf.mxu0
      %1584 = vmatprep.mubr.f32.mxu0 0.0
      %1585 = vmatmul.mubr.f32.gmra.mxu0 %v1477
      %v1586 = vpop.f32.mrf.mxu0
      %v1587 = vadd.f32 %v1470, %v1586
      %v1588 = vpop.f32.mrf.mxu0
      %1589 = vmatprep.mubr.f32.mxu0 0.0
      %1590 = vmatmul.mubr.f32.gmra.mxu0 %v1480
      %v1591 = vpop.f32.mrf.mxu0
      %v1592 = vadd.f32 %v1470, %v1591
      %v1593 = vpop.f32.mrf.mxu0
      %1594 = vmatprep.mubr.f32.mxu0 0.0
      %1595 = vmatmul.mubr.f32.gmra.mxu0 %v1483
      %v1596 = vpop.f32.mrf.mxu0
      %v1597 = vadd.f32 %v1470, %v1596
      %v1598 = vpop.f32.mrf.mxu0
      %1599 = vmatprep.mubr.f32.mxu0 0.0
      %1600 = vmatmul.mubr.f32.gmra.mxu0 %v1486
      %v1601 = vpop.f32.mrf.mxu0
      %v1602 = vadd.f32 %v1470, %v1601
      %v1603 = vpop.f32.mrf.mxu0
      %1604 = vmatprep.mubr.f32.mxu0 0.0
      %1605 = vmatmul.mubr.f32.gmra.mxu0 %v1489
      %v1606 = vpop.f32.mrf.mxu0
      %v1607 = vadd.f32 %v1470, %v1606
      %v1608 = vpop.f32.mrf.mxu0
      %1609 = vmatprep.mubr.f32.mxu0 0.0
      %1610 = vmatmul.mubr.f32.gmra.mxu0 %v1492
      %v1611 = vpop.f32.mrf.mxu0
      %v1612 = vadd.f32 %v1470, %v1611
      %v1613 = vpop.f32.mrf.mxu0
      %1614 = vmatprep.mubr.f32.mxu0 0.0
      %1615 = vmatmul.mubr.f32.gmra.mxu0 %v1495
      %v1616 = vpop.f32.mrf.mxu0
      %v1617 = vadd.f32 %v1470, %v1616
      %v1618 = vpop.f32.mrf.mxu0
      %1619 = vmatprep.mubr.f32.mxu0 0.0
      %1620 = vmatmul.mubr.f32.gmra.mxu0 %v1498
      %v1621 = vpop.f32.mrf.mxu0
      %v1622 = vadd.f32 %v1470, %v1621
      %v1623 = vpop.f32.mrf.mxu0
      %1624 = vmatprep.mubr.f32.mxu0 0.0
      %1625 = vmatmul.mubr.f32.gmra.mxu0 %v1501
      %v1626 = vpop.f32.mrf.mxu0
      %v1627 = vadd.f32 %v1470, %v1626
      %v1628 = vpop.f32.mrf.mxu0
      %1629 = vmatprep.mubr.f32.mxu0 0.0
      %1630 = vmatmul.mubr.f32.gmra.mxu0 %v1504
      %v1631 = vpop.f32.mrf.mxu0
      %v1632 = vadd.f32 %v1470, %v1631
      %v1633 = vpop.f32.mrf.mxu0
      %1634 = vmatprep.mubr.f32.mxu0 0.0
      %1635 = vmatmul.mubr.f32.gmra.mxu0 %v1507
      %v1636 = vpop.f32.mrf.mxu0
      %v1637 = vadd.f32 %v1470, %v1636
      %v1638 = vpop.f32.mrf.mxu0
      %1639 = vmatprep.mubr.f32.mxu0 0.0
      %1640 = vmatmul.mubr.f32.gmra.mxu0 %v1510
      %v1641 = vpop.f32.mrf.mxu0
      %v1642 = vadd.f32 %v1470, %v1641
      %v1643 = vpop.f32.mrf.mxu0
      %1644 = vmatprep.mubr.f32.mxu0 0.0
      %1645 = vmatmul.mubr.f32.gmra.mxu0 %v1513
      %v1646 = vpop.f32.mrf.mxu0
      %v1647 = vadd.f32 %v1470, %v1646
      %v1648 = vpop.f32.mrf.mxu0
      %1649 = vdwg.mxu0
      %v1650 = vld [vmem:[%s11] sm:$0x3]
      %v1652 = vlaneseq
      %v1653 = vshrl.u32 %v1652, 7
      %v1654 = vsub.s32 0, %v1653
      %v1655 = vrot.slane %v1650, %v1654
      %v1656 = vlaneseq
      %v1657 = vshrl.u32 %v1656, 7
      %v1658 = vsub.s32 1, %v1657
      %v1659 = vrot.slane %v1650, %v1658
      %v1662 = vmul.f32 %v585, %v1655
      %v1663 = vmul.f32 %v586, %v1659
      %v1664 = vmul.f32 %v587, %v1655
      %v1665 = vmul.f32 %v588, %v1659
      %v1666 = vmul.f32 %v589, %v1655
      %v1667 = vmul.f32 %v590, %v1659
      %v1668 = vmul.f32 %v591, %v1655
      %v1669 = vmul.f32 %v592, %v1659
      %v1670 = vmul.f32 %v593, %v1655
      %v1671 = vmul.f32 %v594, %v1659
      %v1672 = vmul.f32 %v595, %v1655
      %v1673 = vmul.f32 %v596, %v1659
      %v1674 = vmul.f32 %v597, %v1655
      %v1675 = vmul.f32 %v598, %v1659
      %v1676 = vmul.f32 %v599, %v1655
      %v1677 = vmul.f32 %v600, %v1659
      %v1678 = vmul.f32 %v601, %v1655
      %v1679 = vmul.f32 %v602, %v1659
      %v1680 = vmul.f32 %v603, %v1655
      %v1681 = vmul.f32 %v604, %v1659
      %v1682 = vmul.f32 %v605, %v1655
      %v1683 = vmul.f32 %v606, %v1659
      %v1684 = vmul.f32 %v607, %v1655
      %v1685 = vmul.f32 %v608, %v1659
      %v1686 = vmul.f32 %v609, %v1655
      %v1687 = vmul.f32 %v610, %v1659
      %v1688 = vmul.f32 %v611, %v1655
      %v1689 = vmul.f32 %v612, %v1659
      %v1690 = vsel %vm663, %v1663, 0.0
      %v1691 = vadd.f32 %v1662, %v1690
      %1692 = vadd.xlane.f32.xlu0 %v1691
      %v1693 = vpop.xlane.xlu0 %1692
      %v1694 = vsel %vm663, %v1665, 0.0
      %v1695 = vadd.f32 %v1664, %v1694
      %1696 = vadd.xlane.f32.xlu0 %v1695
      %v1697 = vpop.xlane.xlu0 %1696
      %v1698 = vsel %vm663, %v1667, 0.0
      %v1699 = vadd.f32 %v1666, %v1698
      %1700 = vadd.xlane.f32.xlu0 %v1699
      %v1701 = vpop.xlane.xlu0 %1700
      %v1702 = vsel %vm663, %v1669, 0.0
      %v1703 = vadd.f32 %v1668, %v1702
      %1704 = vadd.xlane.f32.xlu0 %v1703
      %v1705 = vpop.xlane.xlu0 %1704
      %v1706 = vsel %vm663, %v1671, 0.0
      %v1707 = vadd.f32 %v1670, %v1706
      %1708 = vadd.xlane.f32.xlu0 %v1707
      %v1709 = vpop.xlane.xlu0 %1708
      %v1710 = vsel %vm663, %v1673, 0.0
      %v1711 = vadd.f32 %v1672, %v1710
      %1712 = vadd.xlane.f32.xlu0 %v1711
      %v1713 = vpop.xlane.xlu0 %1712
      %v1714 = vsel %vm663, %v1675, 0.0
      %v1715 = vadd.f32 %v1674, %v1714
      %1716 = vadd.xlane.f32.xlu0 %v1715
      %v1717 = vpop.xlane.xlu0 %1716
      %v1718 = vsel %vm663, %v1677, 0.0
      %v1719 = vadd.f32 %v1676, %v1718
      %1720 = vadd.xlane.f32.xlu0 %v1719
      %v1721 = vpop.xlane.xlu0 %1720
      %v1722 = vsel %vm663, %v1679, 0.0
      %v1723 = vadd.f32 %v1678, %v1722
      %1724 = vadd.xlane.f32.xlu0 %v1723
      %v1725 = vpop.xlane.xlu0 %1724
      %v1726 = vsel %vm663, %v1681, 0.0
      %v1727 = vadd.f32 %v1680, %v1726
      %1728 = vadd.xlane.f32.xlu0 %v1727
      %v1729 = vpop.xlane.xlu0 %1728
      %v1730 = vsel %vm663, %v1683, 0.0
      %v1731 = vadd.f32 %v1682, %v1730
      %1732 = vadd.xlane.f32.xlu0 %v1731
      %v1733 = vpop.xlane.xlu0 %1732
      %v1734 = vsel %vm663, %v1685, 0.0
      %v1735 = vadd.f32 %v1684, %v1734
      %1736 = vadd.xlane.f32.xlu0 %v1735
      %v1737 = vpop.xlane.xlu0 %1736
      %v1738 = vsel %vm663, %v1687, 0.0
      %v1739 = vadd.f32 %v1686, %v1738
      %1740 = vadd.xlane.f32.xlu0 %v1739
      %v1741 = vpop.xlane.xlu0 %1740
      %v1742 = vsel %vm663, %v1689, 0.0
      %v1743 = vadd.f32 %v1688, %v1742
      %1744 = vadd.xlane.f32.xlu0 %v1743
      %v1745 = vpop.xlane.xlu0 %1744
      %v1746 = vld [vmem:[%s12] sm:$0x1]
      %v1748 = vlaneseq
      %v1749 = vshrl.u32 %v1748, 7
      %v1750 = vsub.s32 0, %v1749
      %v1751 = vrot.slane %v1746, %v1750
      %v1753 = vmul.f32 %v1582, %v1751
      %v1754 = vmul.f32 %v1587, %v1751
      %v1755 = vmul.f32 %v1592, %v1751
      %v1756 = vmul.f32 %v1597, %v1751
      %v1757 = vmul.f32 %v1602, %v1751
      %v1758 = vmul.f32 %v1607, %v1751
      %v1759 = vmul.f32 %v1612, %v1751
      %v1760 = vmul.f32 %v1617, %v1751
      %v1761 = vmul.f32 %v1622, %v1751
      %v1762 = vmul.f32 %v1627, %v1751
      %v1763 = vmul.f32 %v1632, %v1751
      %v1764 = vmul.f32 %v1637, %v1751
      %v1765 = vmul.f32 %v1642, %v1751
      %v1766 = vmul.f32 %v1647, %v1751
      %vm1767 = vcmask 818176
      %v1768 = vsel %vm1767, %v1753, 0.0
      %1769 = vadd.xlane.f32.xlu0 %v1768
      %v1770 = vpop.xlane.xlu0 %1769
      %v1771 = vsel %vm1767, %v1754, 0.0
      %1772 = vadd.xlane.f32.xlu0 %v1771
      %v1773 = vpop.xlane.xlu0 %1772
      %v1774 = vsel %vm1767, %v1755, 0.0
      %1775 = vadd.xlane.f32.xlu0 %v1774
      %v1776 = vpop.xlane.xlu0 %1775
      %v1777 = vsel %vm1767, %v1756, 0.0
      %1778 = vadd.xlane.f32.xlu0 %v1777
      %v1779 = vpop.xlane.xlu0 %1778
      %v1780 = vsel %vm1767, %v1757, 0.0
      %1781 = vadd.xlane.f32.xlu0 %v1780
      %v1782 = vpop.xlane.xlu0 %1781
      %v1783 = vsel %vm1767, %v1758, 0.0
      %1784 = vadd.xlane.f32.xlu0 %v1783
      %v1785 = vpop.xlane.xlu0 %1784
      %v1786 = vsel %vm1767, %v1759, 0.0
      %1787 = vadd.xlane.f32.xlu0 %v1786
      %v1788 = vpop.xlane.xlu0 %1787
      %v1789 = vsel %vm1767, %v1760, 0.0
      %1790 = vadd.xlane.f32.xlu0 %v1789
      %v1791 = vpop.xlane.xlu0 %1790
      %v1792 = vsel %vm1767, %v1761, 0.0
      %1793 = vadd.xlane.f32.xlu0 %v1792
      %v1794 = vpop.xlane.xlu0 %1793
      %v1795 = vsel %vm1767, %v1762, 0.0
      %1796 = vadd.xlane.f32.xlu0 %v1795
      %v1797 = vpop.xlane.xlu0 %1796
      %v1798 = vsel %vm1767, %v1763, 0.0
      %1799 = vadd.xlane.f32.xlu0 %v1798
      %v1800 = vpop.xlane.xlu0 %1799
      %v1801 = vsel %vm1767, %v1764, 0.0
      %1802 = vadd.xlane.f32.xlu0 %v1801
      %v1803 = vpop.xlane.xlu0 %1802
      %v1804 = vsel %vm1767, %v1765, 0.0
      %1805 = vadd.xlane.f32.xlu0 %v1804
      %v1806 = vpop.xlane.xlu0 %1805
      %v1807 = vsel %vm1767, %v1766, 0.0
      %1808 = vadd.xlane.f32.xlu0 %v1807
      %v1809 = vpop.xlane.xlu0 %1808
      %v1810 = vadd.f32 %v1693, %v1770
      %v1811 = vadd.f32 %v1697, %v1773
      %v1812 = vadd.f32 %v1701, %v1776
      %v1813 = vadd.f32 %v1705, %v1779
      %v1814 = vadd.f32 %v1709, %v1782
      %v1815 = vadd.f32 %v1713, %v1785
      %v1816 = vadd.f32 %v1717, %v1788
      %v1817 = vadd.f32 %v1721, %v1791
      %v1818 = vadd.f32 %v1725, %v1794
      %v1819 = vadd.f32 %v1729, %v1797
      %v1820 = vadd.f32 %v1733, %v1800
      %v1821 = vadd.f32 %v1737, %v1803
      %v1822 = vadd.f32 %v1741, %v1806
      %v1823 = vadd.f32 %v1745, %v1809
      %v1824 = vld [vmem:[#allocation2] sm:$0x1]
      %v1826 = vlaneseq
      %v1827 = vshrl.u32 %v1826, 7
      %v1828 = vsub.s32 0, %v1827
      %v1829 = vrot.slane %v1824, %v1828
      %v1831 = vadd.f32 %v1810, %v1829
      %v1832 = vadd.f32 %v1811, %v1829
      %v1833 = vadd.f32 %v1812, %v1829
      %v1834 = vadd.f32 %v1813, %v1829
      %v1835 = vadd.f32 %v1814, %v1829
      %v1836 = vadd.f32 %v1815, %v1829
      %v1837 = vadd.f32 %v1816, %v1829
      %v1838 = vadd.f32 %v1817, %v1829
      %v1839 = vadd.f32 %v1818, %v1829
      %v1840 = vadd.f32 %v1819, %v1829
      %v1841 = vadd.f32 %v1820, %v1829
      %v1842 = vadd.f32 %v1821, %v1829
      %v1843 = vadd.f32 %v1822, %v1829
      %v1844 = vadd.f32 %v1823, %v1829
      %v1845 = vxor.u32 %v1831, 2147483648
      %v1846 = vxor.u32 %v1832, 2147483648
      %v1847 = vxor.u32 %v1833, 2147483648
      %v1848 = vxor.u32 %v1834, 2147483648
      %v1849 = vxor.u32 %v1835, 2147483648
      %v1850 = vxor.u32 %v1836, 2147483648
      %v1851 = vxor.u32 %v1837, 2147483648
      %v1852 = vxor.u32 %v1838, 2147483648
      %v1853 = vxor.u32 %v1839, 2147483648
      %v1854 = vxor.u32 %v1840, 2147483648
      %v1855 = vxor.u32 %v1841, 2147483648
      %v1856 = vxor.u32 %v1842, 2147483648
      %v1857 = vxor.u32 %v1843, 2147483648
      %v1858 = vxor.u32 %v1844, 2147483648
      %v1859 = vmul.f32 %v1845, 1.442695
      %v1860 = vpow.pop %v1859
      %v1861 = vmul.f32 %v1846, 1.442695
      %v1862 = vpow.pop %v1861
      %v1863 = vmul.f32 %v1847, 1.442695
      %v1864 = vpow.pop %v1863
      %v1865 = vmul.f32 %v1848, 1.442695
      %v1866 = vpow.pop %v1865
      %v1867 = vmul.f32 %v1849, 1.442695
      %v1868 = vpow.pop %v1867
      %v1869 = vmul.f32 %v1850, 1.442695
      %v1870 = vpow.pop %v1869
      %v1871 = vmul.f32 %v1851, 1.442695
      %v1872 = vpow.pop %v1871
      %v1873 = vmul.f32 %v1852, 1.442695
      %v1874 = vpow.pop %v1873
      %v1875 = vmul.f32 %v1853, 1.442695
      %v1876 = vpow.pop %v1875
      %v1877 = vmul.f32 %v1854, 1.442695
      %v1878 = vpow.pop %v1877
      %v1879 = vmul.f32 %v1855, 1.442695
      %v1880 = vpow.pop %v1879
      %v1881 = vmul.f32 %v1856, 1.442695
      %v1882 = vpow.pop %v1881
      %v1883 = vmul.f32 %v1857, 1.442695
      %v1884 = vpow.pop %v1883
      %v1885 = vmul.f32 %v1858, 1.442695
      %v1886 = vpow.pop %v1885
      %v1887 = vadd.f32 %v1860, 1.0
      %v1888 = vadd.f32 %v1862, 1.0
      %v1889 = vadd.f32 %v1864, 1.0
      %v1890 = vadd.f32 %v1866, 1.0
      %v1891 = vadd.f32 %v1868, 1.0
      %v1892 = vadd.f32 %v1870, 1.0
      %v1893 = vadd.f32 %v1872, 1.0
      %v1894 = vadd.f32 %v1874, 1.0
      %v1895 = vadd.f32 %v1876, 1.0
      %v1896 = vadd.f32 %v1878, 1.0
      %v1897 = vadd.f32 %v1880, 1.0
      %v1898 = vadd.f32 %v1882, 1.0
      %v1899 = vadd.f32 %v1884, 1.0
      %v1900 = vadd.f32 %v1886, 1.0
      %v1901 = vrcp.pop %v1887
      %v1902 = vmul.f32 1.0, %v1901
      %v1903 = vrcp.pop %v1888
      %v1904 = vmul.f32 1.0, %v1903
      %v1905 = vrcp.pop %v1889
      %v1906 = vmul.f32 1.0, %v1905
      %v1907 = vrcp.pop %v1890
      %v1908 = vmul.f32 1.0, %v1907
      %v1909 = vrcp.pop %v1891
      %v1910 = vmul.f32 1.0, %v1909
      %v1911 = vrcp.pop %v1892
      %v1912 = vmul.f32 1.0, %v1911
      %v1913 = vrcp.pop %v1893
      %v1914 = vmul.f32 1.0, %v1913
      %v1915 = vrcp.pop %v1894
      %v1916 = vmul.f32 1.0, %v1915
      %v1917 = vrcp.pop %v1895
      %v1918 = vmul.f32 1.0, %v1917
      %v1919 = vrcp.pop %v1896
      %v1920 = vmul.f32 1.0, %v1919
      %v1921 = vrcp.pop %v1897
      %v1922 = vmul.f32 1.0, %v1921
      %v1923 = vrcp.pop %v1898
      %v1924 = vmul.f32 1.0, %v1923
      %v1925 = vrcp.pop %v1899
      %v1926 = vmul.f32 1.0, %v1925
      %v1927 = vrcp.pop %v1900
      %v1928 = vmul.f32 1.0, %v1927
      %vm1929 = vcmask 7168
      %1930 = vst.msk [vmem:[%s499] sm:$0xff] %vm1929, %v1902
      %1931 = vst.msk [vmem:[%s499 + $0x8] sm:$0xff] %vm1929, %v1904
      %1932 = vst.msk [vmem:[%s499 + $0x10] sm:$0xff] %vm1929, %v1906
      %1933 = vst.msk [vmem:[%s499 + $0x18] sm:$0xff] %vm1929, %v1908
      %1934 = vst.msk [vmem:[%s499 + $0x20] sm:$0xff] %vm1929, %v1910
      %1935 = vst.msk [vmem:[%s499 + $0x28] sm:$0xff] %vm1929, %v1912
      %1936 = vst.msk [vmem:[%s499 + $0x30] sm:$0xff] %vm1929, %v1914
      %1937 = vst.msk [vmem:[%s499 + $0x38] sm:$0xff] %vm1929, %v1916
      %1938 = vst.msk [vmem:[%s499 + $0x40] sm:$0xff] %vm1929, %v1918
      %1939 = vst.msk [vmem:[%s499 + $0x48] sm:$0xff] %vm1929, %v1920
      %1940 = vst.msk [vmem:[%s499 + $0x50] sm:$0xff] %vm1929, %v1922
      %1941 = vst.msk [vmem:[%s499 + $0x58] sm:$0xff] %vm1929, %v1924
      %1942 = vst.msk [vmem:[%s499 + $0x60] sm:$0xff] %vm1929, %v1926
      %1943 = vst.msk [vmem:[%s499 + $0x68] sm:$0xff] %vm1929, %v1928
      %s1944 = smul.u32 14, %s27
      %p1945 = scmp.lt.s32.totalorder %s1944, 27
      %s1946 = scalar_select %p1945, %s1944, 27
      %s1947 = smul.addr %s1946, 8
      %s1948 = scalar_lea.vmem %s14, %s1947
      // Predicated region
      $region77: #{tpu_custom_call.1} parent=75 // pred_check
        %p1949 = pneg %p349
      $region78: #{tpu_custom_call.1} parent=75 // pred_check_branch
        %1951 = sbr.rel (%p1949) target = $region80
      $region79: #{tpu_custom_call.1} parent=75 // pred_region
        %s1952 = smul.u32 14, %s27
      $region80: #{tpu_custom_call.1} parent=75 // pred_fallthru
        _
    $region76: #{tpu_custom_call.1} parent=5 // pred_fallthru
      _
    %p1953 = scmp.le.s32.totalorder 2, %s22
    // Predicated region
    $region81: #{tpu_custom_call.1} parent=5 // pred_check
      %p1954 = pneg %p1953
    $region82: #{tpu_custom_call.1} parent=5 // pred_check_branch
      %1956 = sbr.rel (%p1954) target = $region84
    $region83: #{tpu_custom_call.1} parent=5 // pred_region
      %s1957 = ssub.s32 %s22, 2
      // Predicated region
      $region85: #{tpu_custom_call.1} parent=83 // pred_check
        %p1958 = pneg %p355
      $region86: #{tpu_custom_call.1} parent=83 // pred_check_branch
        %1960 = sbr.rel (%p1958) target = $region88
      $region87: #{tpu_custom_call.1} parent=83 // pred_region
        %s1961 = smul.u32 14, %s28
        %p1962 = scmp.lt.s32.totalorder %s1961, 27
        %s1963 = scalar_select %p1962, %s1961, 27
        %s1964 = smul.addr %s1963, 8
        %s1965 = scalar_lea.vmem %s14, %s1964
      $region88: #{tpu_custom_call.1} parent=83 // pred_fallthru
        _
    $region84: #{tpu_custom_call.1} parent=5 // pred_fallthru
      _
  $region6: #{tpu_custom_call.1} parent=0 // loop_footer
    %s26 = sadd.s32 1, %s22
  $region7: #{tpu_custom_call.1} parent=0 // loop_footer_branch
    %21 = sbr.rel target = $region3
  $region8: #{tpu_custom_call.1} parent=0 // loop_exit
    _

</llo_original>
